<compile_context>
chip_gen: v7x
topology: tpu7x:2x2x1
jax: 0.10.0
libtpu: 0.0.40
codegen_flags: <defaults>
</compile_context>

<pallas_src>
import jax
import jax.numpy as jnp
from jax.experimental import pallas as pl
from jax.experimental.pallas import tpu as pltpu

_VMEM_LIMIT = 32 * 1024 * 1024   # explicit scoped-VMEM budget (safe on v7x's 64 MiB)
_FC_TK_TARGET = 10240            # fc1 K tile (multiple of 128); 4 steps for K=40000


def _round_up(x, m):
    return -(-x // m) * m


def _col_tiles(ncols):
    """Pad the spatial (lane) axis to a multiple of 128 and pick a column tile size."""
    nc_pad = _round_up(ncols, 128)
    units = nc_pad // 128
    for nt in (4, 2):                       # split for megacore only if it divides evenly
        if units % nt == 0 and (nc_pad // nt) >= 1024:
            return nc_pad // nt, nc_pad
    return nc_pad, nc_pad


def _fc_tiling(k):
    if k <= _FC_TK_TARGET:
        return k, k
    return _FC_TK_TARGET, _round_up(k, _FC_TK_TARGET)


# ---------------------- fused conv + bias + ReLU + maxpool ---------------------- #

def _conv_relu_pool_kernel(p00_ref, p01_ref, p10_ref, p11_ref, w_ref, b_ref, o_ref):
    """One (image, column-tile): 3x3/s1/p1 conv + bias + ReLU + 2x2/s2 max-pool.

    p{a}{b}_ref: (1, 9*Cin, tc) bf16 tap patches for pool parity (a, b); column q of the
                 tile is pooled output position (ho, wo) flattened as ho*Wo + wo.
    w_ref:       (Cout, 9*Cin) bf16 conv taps (K order = (kh*3+kw)*Cin + cin).
    b_ref:       (Cout, 1) f32 bias (broadcast along lanes).
    o_ref:       (1, Cout, tc) pooled output, lane-dense.
    """
    w = w_ref[...]
    acc = jnp.dot(w, p00_ref[0], preferred_element_type=jnp.float32)
    for p_ref in (p01_ref, p10_ref, p11_ref):
        acc = jnp.maximum(acc, jnp.dot(w, p_ref[0], preferred_element_type=jnp.float32))
    # relu(max(conv) + b) == max(relu(conv + b)) since b is constant over the pool window.
    o_ref[0] = jnp.maximum(acc + b_ref[...], 0.0).astype(o_ref.dtype)


def conv3x3_relu_pool(x_nchw, w_k, b_k, *, out_dtype=jnp.bfloat16):
    """Conv2d(3,3,s=1,p=1) + ReLU + MaxPool2d(2,2).  x: (N, Cin, H, W) -> (N, Cout, H/2, W/2)."""
    N, Cin, H, W = x_nchw.shape
    Cout = w_k.shape[0]
    assert w_k.shape[1] == 9 * Cin
    assert H % 2 == 0 and W % 2 == 0, "fused MaxPool2d(2,2) assumes even H and W"
    Ho, Wo = H // 2, W // 2
    ncols = Ho * Wo
    tc, nc_pad = _col_tiles(ncols)

    xp = jnp.pad(x_nchw, ((0, 0), (0, 0), (1, 1), (1, 1))).astype(jnp.bfloat16)

    # Per pool-parity (h2, w2): patches[n, (kh*3+kw)*Cin + c, ho*Wo + wo]
    #   = xp[n, c, 2*ho + h2 + kh, 2*wo + w2 + kw]   (XLA glue, built once per call).
    patches = []
    for h2 in (0, 1):
        for w2 in (0, 1):
            taps = [xp[:, :, h2 + di: h2 + di + 2 * Ho: 2, w2 + dj: w2 + dj + 2 * Wo: 2]
                    for di in range(3) for dj in range(3)]
            p = jnp.stack(taps, axis=1).reshape(N, 9 * Cin, ncols)
            if nc_pad != ncols:
                p = jnp.pad(p, ((0, 0), (0, 0), (0, nc_pad - ncols)))
            patches.append(p)

    patch_spec = pl.BlockSpec((1, 9 * Cin, tc), lambda n, j: (n, 0, j))
    out = pl.pallas_call(
        _conv_relu_pool_kernel,
        out_shape=jax.ShapeDtypeStruct((N, Cout, nc_pad), out_dtype),
        grid_spec=pltpu.PrefetchScalarGridSpec(
            num_scalar_prefetch=0,
            grid=(N, nc_pad // tc),
            in_specs=[patch_spec, patch_spec, patch_spec, patch_spec,
                      pl.BlockSpec((Cout, 9 * Cin), lambda n, j: (0, 0)),
                      pl.BlockSpec((Cout, 1), lambda n, j: (0, 0))],
            out_specs=pl.BlockSpec((1, Cout, tc), lambda n, j: (n, 0, j)),
        ),
        compiler_params=pltpu.CompilerParams(
            dimension_semantics=("parallel", "parallel"),
            vmem_limit_bytes=_VMEM_LIMIT,
        ),
    )(*patches, w_k, b_k)
    return out[:, :, :ncols].reshape(N, Cout, Ho, Wo)


# ----------------------- fused fc1 (+ReLU) + fc2 head --------------------------- #

def _fc_fused_kernel(x_ref, w1_ref, b1_ref, w2_ref, b2_ref, o_ref, acc_ref):
    """logits = relu(x @ w1 + b1) @ w2 + b2, K of fc1 streamed over the grid axis."""
    k = pl.program_id(0)

    @pl.when(k == 0)
    def _init():
        acc_ref[...] = jnp.zeros_like(acc_ref)

    acc_ref[...] += jnp.dot(x_ref[...], w1_ref[...], preferred_element_type=jnp.float32)

    @pl.when(k == pl.num_programs(0) - 1)
    def _finalize():
        h = jnp.maximum(acc_ref[...] + b1_ref[...], 0.0)                    # fc1 + ReLU (f32)
        logits = jnp.dot(h.astype(jnp.bfloat16), w2_ref[...],
                         preferred_element_type=jnp.float32) + b2_ref[...]  # fc2
        o_ref[...] = logits.astype(o_ref.dtype)


def mlp_head(x, w1_pad, b1, w2, b2, *, out_dtype=jnp.float32):
    """One pallas_call for fc1+ReLU+fc2.  w1_pad is pre-padded (in prepare_params) to K_pad rows."""
    M, K = x.shape
    tk, K_pad = _fc_tiling(K)
    assert w1_pad.shape[0] == K_pad, "fc1 weight must be pre-padded in prepare_params"
    Nh = w1_pad.shape[1]
    Nout = w2.shape[1]

    xb = x.astype(jnp.bfloat16)
    if K_pad != K:
        xb = jnp.pad(xb, ((0, 0), (0, K_pad - K)))   # activation pad only (cheap)
    b1r = b1.reshape(1, Nh).astype(jnp.float32)
    b2r = b2.reshape(1, Nout).astype(jnp.float32)
    w2b = w2.astype(jnp.bfloat16)

    return pl.pallas_call(
        _fc_fused_kernel,
        out_shape=jax.ShapeDtypeStruct((M, Nout), out_dtype),
        grid_spec=pltpu.PrefetchScalarGridSpec(
            num_scalar_prefetch=0,
            grid=(K_pad // tk,),
            in_specs=[pl.BlockSpec((M, tk), lambda k: (0, k)),
                      pl.BlockSpec((tk, Nh), lambda k: (k, 0)),
                      pl.BlockSpec((1, Nh), lambda k: (0, 0)),
                      pl.BlockSpec((Nh, Nout), lambda k: (0, 0)),
                      pl.BlockSpec((1, Nout), lambda k: (0, 0))],
            out_specs=pl.BlockSpec((M, Nout), lambda k: (0, 0)),
            scratch_shapes=[pltpu.VMEM((M, Nh), jnp.float32)],
        ),
        compiler_params=pltpu.CompilerParams(
            dimension_semantics=("arbitrary",),
            vmem_limit_bytes=_VMEM_LIMIT,
        ),
    )(xb, w1_pad, b1r, w2b, b2r)


# ----------------------------------- model -------------------------------------- #

def screen_action_net(params, x_nchw):
    """Forward pass matching ScreenActionNet.forward (input NCHW float32)."""
    x = conv3x3_relu_pool(x_nchw, params["conv1_wk"], params["conv1_bk"])   # conv1+relu+pool
    x = conv3x3_relu_pool(x, params["conv2_wk"], params["conv2_bk"])        # conv2+relu+pool
    N = x.shape[0]
    x = x.reshape(N, -1)            # NCHW-flat output == torch x.view(N, -1)
    return mlp_head(x, params["fc1_w"], params["fc1_b"],
                    params["fc2_w"], params["fc2_b"], out_dtype=jnp.float32)


def init_params(key, H, W):
    """Synthetic torch-style parameters (uniform(-1/sqrt(fan_in), +bound))."""
    ks = jax.random.split(key, 8)

    def u(k, shape, fan_in):
        bound = 1.0 / jnp.sqrt(float(fan_in))
        return jax.random.uniform(k, shape, jnp.float32, -bound, bound)

    conv_out = 32 * (H // 4) * (W // 4)
    return {
        "conv1_w": u(ks[0], (16, 3, 3, 3), 3 * 9),      # torch OIHW
        "conv1_b": u(ks[1], (16,), 3 * 9),
        "conv2_w": u(ks[2], (32, 16, 3, 3), 16 * 9),
        "conv2_b": u(ks[3], (32,), 16 * 9),
        "fc1_w": u(ks[4], (conv_out, 128), conv_out),   # (in, out)
        "fc1_b": u(ks[5], (128,), conv_out),
        "fc2_w": u(ks[6], (128, 4), 128),
        "fc2_b": u(ks[7], (4,), 128),
    }


def prepare_params(params, H, W):
    """One-time weight massaging (outside the forward):
    - conv weights -> (Cout, 9*Cin) bf16 taps, biases -> (Cout, 1) f32;
    - fc1 weight cast to bf16 and K-padded ONCE to the kernel's K tiling;
    - fc2 weight cast to bf16."""
    p = {}
    for i in (1, 2):
        w = params[f"conv{i}_w"]                            # (Cout, Cin, 3, 3)
        cout, cin = w.shape[0], w.shape[1]
        p[f"conv{i}_wk"] = jnp.transpose(w, (0, 2, 3, 1)).reshape(cout, 9 * cin).astype(jnp.bfloat16)
        p[f"conv{i}_bk"] = params[f"conv{i}_b"].reshape(cout, 1).astype(jnp.float32)
    conv_out = params["fc1_w"].shape[0]
    _, K_pad = _fc_tiling(conv_out)
    w1 = params["fc1_w"].astype(jnp.bfloat16)
    if K_pad != conv_out:
        w1 = jnp.pad(w1, ((0, K_pad - conv_out), (0, 0)))
    p["fc1_w"] = w1
    p["fc1_b"] = params["fc1_b"]
    p["fc2_w"] = params["fc2_w"].astype(jnp.bfloat16)
    p["fc2_b"] = params["fc2_b"]
    return p


def _reference_forward(raw, x):
    """Pure-JAX f32 reference mirroring the PyTorch module."""
    def conv_block(x, w, b):
        y = jax.lax.conv_general_dilated(x, w, (1, 1), ((1, 1), (1, 1)),
                                         dimension_numbers=("NCHW", "OIHW", "NCHW"))
        y = jax.nn.relu(y + b[None, :, None, None])
        return jax.lax.reduce_window(y, -jnp.inf, jax.lax.max,
                                     (1, 1, 2, 2), (1, 1, 2, 2), "VALID")
    x = conv_block(x, raw["conv1_w"], raw["conv1_b"])
    x = conv_block(x, raw["conv2_w"], raw["conv2_b"])
    x = x.reshape(x.shape[0], -1)
    x = jax.nn.relu(x @ raw["fc1_w"] + raw["fc1_b"])
    return x @ raw["fc2_w"] + raw["fc2_b"]


if __name__ == "__main__":
    # Small shapes consistent with the module: torch derives fc1's input size from the
    # input spatial dims (100x200 there); here 16x16 -> fc1 in = 32*4*4 = 512.
    N, C, H, W = 2, 3, 16, 16
    key = jax.random.PRNGKey(0)
    kx, kp = jax.random.split(key)
    x = jax.random.normal(kx, (N, C, H, W), dtype=jnp.float32)
    raw_params = init_params(kp, H, W)
    params = prepare_params(raw_params, H, W)

    fwd = jax.jit(screen_action_net)
    out = jax.block_until_ready(fwd(params, x))
    assert out.shape == (N, 4) and out.dtype == jnp.float32

    ref = _reference_forward(raw_params, x)           # bf16 matmuls -> small tolerance
    err = float(jnp.max(jnp.abs(out - ref)))
    assert err < 5e-2, f"mismatch vs f32 reference: max abs err {err}"
    print("KERNEL_OK")
</pallas_src>

<mosaic_0001>
module attributes {stable_mosaic.version = 11 : i64} {
  func.func @_conv_relu_pool_kernel(%arg0: i32, %arg1: i32, %arg2: memref<1x27x128xbf16, #tpu.memory_space<vmem>>, %arg3: memref<1x27x128xbf16, #tpu.memory_space<vmem>>, %arg4: memref<1x27x128xbf16, #tpu.memory_space<vmem>>, %arg5: memref<1x27x128xbf16, #tpu.memory_space<vmem>>, %arg6: memref<16x27xbf16, #tpu.memory_space<vmem>>, %arg7: memref<16x1xf32, #tpu.memory_space<vmem>>, %arg8: memref<1x16x128xbf16, #tpu.memory_space<vmem>>) attributes {dimension_semantics = [#tpu.dimension_semantics<parallel>, #tpu.dimension_semantics<parallel>], iteration_bounds = array<i64: 2, 1>, scalar_prefetch = 0 : i64, scratch_operands = 0 : i64, tpu.core_type = #tpu.core_type<tc>, window_params = [{transform_indices = @transform_0, window_bounds = array<i64: 1, 27, 128>}, {transform_indices = @transform_1, window_bounds = array<i64: 1, 27, 128>}, {transform_indices = @transform_2, window_bounds = array<i64: 1, 27, 128>}, {transform_indices = @transform_3, window_bounds = array<i64: 1, 27, 128>}, {pipeline_mode = #tpu.pipeline_mode<synchronous>, transform_indices = @transform_4, window_bounds = array<i64: 16, 27>}, {pipeline_mode = #tpu.pipeline_mode<synchronous>, transform_indices = @transform_5, window_bounds = array<i64: 16, 1>}, {transform_indices = @transform_6, window_bounds = array<i64: 1, 16, 128>}]} {
    %c0 = arith.constant 0 : index
    %c0_0 = arith.constant 0 : index
    %0 = vector.load %arg6[%c0, %c0_0] : memref<16x27xbf16, #tpu.memory_space<vmem>>, vector<16x27xbf16>
    %c0_1 = arith.constant 0 : index
    %c0_2 = arith.constant 0 : index
    %c0_3 = arith.constant 0 : index
    %1 = vector.load %arg2[%c0_1, %c0_2, %c0_3] : memref<1x27x128xbf16, #tpu.memory_space<vmem>>, vector<1x27x128xbf16>
    %2 = vector.shape_cast %1 : vector<1x27x128xbf16> to vector<27x128xbf16>
    %cst = arith.constant dense<0.000000e+00> : vector<16x128xf32>
    %3 = tpu.matmul %0, %2, %cst {dimension_numbers = #tpu.dot_dimension_numbers<[1], [0], [0], [1], [0, 0, 1, 1], [], []>} : vector<16x27xbf16>, vector<27x128xbf16>, vector<16x128xf32> -> vector<16x128xf32>
    %c0_4 = arith.constant 0 : index
    %c0_5 = arith.constant 0 : index
    %c0_6 = arith.constant 0 : index
    %4 = vector.load %arg3[%c0_4, %c0_5, %c0_6] : memref<1x27x128xbf16, #tpu.memory_space<vmem>>, vector<1x27x128xbf16>
    %5 = vector.shape_cast %4 : vector<1x27x128xbf16> to vector<27x128xbf16>
    %cst_7 = arith.constant dense<0.000000e+00> : vector<16x128xf32>
    %6 = tpu.matmul %0, %5, %cst_7 {dimension_numbers = #tpu.dot_dimension_numbers<[1], [0], [0], [1], [0, 0, 1, 1], [], []>} : vector<16x27xbf16>, vector<27x128xbf16>, vector<16x128xf32> -> vector<16x128xf32>
    %7 = arith.maximumf %3, %6 : vector<16x128xf32>
    %c0_8 = arith.constant 0 : index
    %c0_9 = arith.constant 0 : index
    %c0_10 = arith.constant 0 : index
    %8 = vector.load %arg4[%c0_8, %c0_9, %c0_10] : memref<1x27x128xbf16, #tpu.memory_space<vmem>>, vector<1x27x128xbf16>
    %9 = vector.shape_cast %8 : vector<1x27x128xbf16> to vector<27x128xbf16>
    %cst_11 = arith.constant dense<0.000000e+00> : vector<16x128xf32>
    %10 = tpu.matmul %0, %9, %cst_11 {dimension_numbers = #tpu.dot_dimension_numbers<[1], [0], [0], [1], [0, 0, 1, 1], [], []>} : vector<16x27xbf16>, vector<27x128xbf16>, vector<16x128xf32> -> vector<16x128xf32>
    %11 = arith.maximumf %7, %10 : vector<16x128xf32>
    %c0_12 = arith.constant 0 : index
    %c0_13 = arith.constant 0 : index
    %c0_14 = arith.constant 0 : index
    %12 = vector.load %arg5[%c0_12, %c0_13, %c0_14] : memref<1x27x128xbf16, #tpu.memory_space<vmem>>, vector<1x27x128xbf16>
    %13 = vector.shape_cast %12 : vector<1x27x128xbf16> to vector<27x128xbf16>
    %cst_15 = arith.constant dense<0.000000e+00> : vector<16x128xf32>
    %14 = tpu.matmul %0, %13, %cst_15 {dimension_numbers = #tpu.dot_dimension_numbers<[1], [0], [0], [1], [0, 0, 1, 1], [], []>} : vector<16x27xbf16>, vector<27x128xbf16>, vector<16x128xf32> -> vector<16x128xf32>
    %15 = arith.maximumf %11, %14 : vector<16x128xf32>
    %c0_16 = arith.constant 0 : index
    %c0_17 = arith.constant 0 : index
    %16 = vector.load %arg7[%c0_16, %c0_17] : memref<16x1xf32, #tpu.memory_space<vmem>>, vector<16x1xf32>
    %17 = vector.broadcast %16 : vector<16x1xf32> to vector<16x128xf32>
    %18 = arith.addf %15, %17 : vector<16x128xf32>
    %cst_18 = arith.constant 0.000000e+00 : f32
    %19 = vector.broadcast %cst_18 : f32 to vector<16x128xf32>
    %20 = arith.maximumf %18, %19 : vector<16x128xf32>
    %21 = arith.truncf %20 : vector<16x128xf32> to vector<16x128xbf16>
    %c0_19 = arith.constant 0 : index
    %c0_20 = arith.constant 0 : index
    %c0_21 = arith.constant 0 : index
    %22 = vector.load %arg8[%c0_19, %c0_20, %c0_21] : memref<1x16x128xbf16, #tpu.memory_space<vmem>>, vector<1x16x128xbf16>
    %23 = vector.shape_cast %22 : vector<1x16x128xbf16> to vector<16x128xbf16>
    %24 = vector.shape_cast %21 : vector<16x128xbf16> to vector<1x16x128xbf16>
    tpu.vector_store %arg8[%c0_19, %c0_20, %c0_21], %24 {strides = array<i32>} : memref<1x16x128xbf16, #tpu.memory_space<vmem>>, vector<1x16x128xbf16>,
    return
  }
  func.func @transform_0(%arg0: i32, %arg1: i32) -> (i32, i32, i32) {
    %c0_i32 = arith.constant 0 : i32
    %c0_i32_0 = arith.constant 0 : i32
    return %arg0, %c0_i32, %arg1 : i32, i32, i32
  }
  func.func @transform_1(%arg0: i32, %arg1: i32) -> (i32, i32, i32) {
    %c0_i32 = arith.constant 0 : i32
    %c0_i32_0 = arith.constant 0 : i32
    return %arg0, %c0_i32, %arg1 : i32, i32, i32
  }
  func.func @transform_2(%arg0: i32, %arg1: i32) -> (i32, i32, i32) {
    %c0_i32 = arith.constant 0 : i32
    %c0_i32_0 = arith.constant 0 : i32
    return %arg0, %c0_i32, %arg1 : i32, i32, i32
  }
  func.func @transform_3(%arg0: i32, %arg1: i32) -> (i32, i32, i32) {
    %c0_i32 = arith.constant 0 : i32
    %c0_i32_0 = arith.constant 0 : i32
    return %arg0, %c0_i32, %arg1 : i32, i32, i32
  }
  func.func @transform_4(%arg0: i32, %arg1: i32) -> (i32, i32) {
    %c0_i32 = arith.constant 0 : i32
    %c0_i32_0 = arith.constant 0 : i32
    %c0_i32_1 = arith.constant 0 : i32
    return %c0_i32, %c0_i32_0 : i32, i32
  }
  func.func @transform_5(%arg0: i32, %arg1: i32) -> (i32, i32) {
    %c0_i32 = arith.constant 0 : i32
    %c0_i32_0 = arith.constant 0 : i32
    %c0_i32_1 = arith.constant 0 : i32
    return %c0_i32, %c0_i32_0 : i32, i32
  }
  func.func @transform_6(%arg0: i32, %arg1: i32) -> (i32, i32, i32) {
    %c0_i32 = arith.constant 0 : i32
    %c0_i32_0 = arith.constant 0 : i32
    return %arg0, %c0_i32, %arg1 : i32, i32, i32
  }
}

module attributes {stable_mosaic.version = 11 : i64} {
  func.func @_conv_relu_pool_kernel(%arg0: i32, %arg1: i32, %arg2: memref<1x144x128xbf16, #tpu.memory_space<vmem>>, %arg3: memref<1x144x128xbf16, #tpu.memory_space<vmem>>, %arg4: memref<1x144x128xbf16, #tpu.memory_space<vmem>>, %arg5: memref<1x144x128xbf16, #tpu.memory_space<vmem>>, %arg6: memref<32x144xbf16, #tpu.memory_space<vmem>>, %arg7: memref<32x1xf32, #tpu.memory_space<vmem>>, %arg8: memref<1x32x128xbf16, #tpu.memory_space<vmem>>) attributes {dimension_semantics = [#tpu.dimension_semantics<parallel>, #tpu.dimension_semantics<parallel>], iteration_bounds = array<i64: 2, 1>, scalar_prefetch = 0 : i64, scratch_operands = 0 : i64, tpu.core_type = #tpu.core_type<tc>, window_params = [{transform_indices = @transform_0, window_bounds = array<i64: 1, 144, 128>}, {transform_indices = @transform_1, window_bounds = array<i64: 1, 144, 128>}, {transform_indices = @transform_2, window_bounds = array<i64: 1, 144, 128>}, {transform_indices = @transform_3, window_bounds = array<i64: 1, 144, 128>}, {pipeline_mode = #tpu.pipeline_mode<synchronous>, transform_indices = @transform_4, window_bounds = array<i64: 32, 144>}, {pipeline_mode = #tpu.pipeline_mode<synchronous>, transform_indices = @transform_5, window_bounds = array<i64: 32, 1>}, {transform_indices = @transform_6, window_bounds = array<i64: 1, 32, 128>}]} {
    %c0 = arith.constant 0 : index
    %c0_0 = arith.constant 0 : index
    %0 = vector.load %arg6[%c0, %c0_0] : memref<32x144xbf16, #tpu.memory_space<vmem>>, vector<32x144xbf16>
    %c0_1 = arith.constant 0 : index
    %c0_2 = arith.constant 0 : index
    %c0_3 = arith.constant 0 : index
    %1 = vector.load %arg2[%c0_1, %c0_2, %c0_3] : memref<1x144x128xbf16, #tpu.memory_space<vmem>>, vector<1x144x128xbf16>
    %2 = vector.shape_cast %1 : vector<1x144x128xbf16> to vector<144x128xbf16>
    %cst = arith.constant dense<0.000000e+00> : vector<32x128xf32>
    %3 = tpu.matmul %0, %2, %cst {dimension_numbers = #tpu.dot_dimension_numbers<[1], [0], [0], [1], [0, 0, 1, 1], [], []>} : vector<32x144xbf16>, vector<144x128xbf16>, vector<32x128xf32> -> vector<32x128xf32>
    %c0_4 = arith.constant 0 : index
    %c0_5 = arith.constant 0 : index
    %c0_6 = arith.constant 0 : index
    %4 = vector.load %arg3[%c0_4, %c0_5, %c0_6] : memref<1x144x128xbf16, #tpu.memory_space<vmem>>, vector<1x144x128xbf16>
    %5 = vector.shape_cast %4 : vector<1x144x128xbf16> to vector<144x128xbf16>
    %cst_7 = arith.constant dense<0.000000e+00> : vector<32x128xf32>
    %6 = tpu.matmul %0, %5, %cst_7 {dimension_numbers = #tpu.dot_dimension_numbers<[1], [0], [0], [1], [0, 0, 1, 1], [], []>} : vector<32x144xbf16>, vector<144x128xbf16>, vector<32x128xf32> -> vector<32x128xf32>
    %7 = arith.maximumf %3, %6 : vector<32x128xf32>
    %c0_8 = arith.constant 0 : index
    %c0_9 = arith.constant 0 : index
    %c0_10 = arith.constant 0 : index
    %8 = vector.load %arg4[%c0_8, %c0_9, %c0_10] : memref<1x144x128xbf16, #tpu.memory_space<vmem>>, vector<1x144x128xbf16>
    %9 = vector.shape_cast %8 : vector<1x144x128xbf16> to vector<144x128xbf16>
    %cst_11 = arith.constant dense<0.000000e+00> : vector<32x128xf32>
    %10 = tpu.matmul %0, %9, %cst_11 {dimension_numbers = #tpu.dot_dimension_numbers<[1], [0], [0], [1], [0, 0, 1, 1], [], []>} : vector<32x144xbf16>, vector<144x128xbf16>, vector<32x128xf32> -> vector<32x128xf32>
    %11 = arith.maximumf %7, %10 : vector<32x128xf32>
    %c0_12 = arith.constant 0 : index
    %c0_13 = arith.constant 0 : index
    %c0_14 = arith.constant 0 : index
    %12 = vector.load %arg5[%c0_12, %c0_13, %c0_14] : memref<1x144x128xbf16, #tpu.memory_space<vmem>>, vector<1x144x128xbf16>
    %13 = vector.shape_cast %12 : vector<1x144x128xbf16> to vector<144x128xbf16>
    %cst_15 = arith.constant dense<0.000000e+00> : vector<32x128xf32>
    %14 = tpu.matmul %0, %13, %cst_15 {dimension_numbers = #tpu.dot_dimension_numbers<[1], [0], [0], [1], [0, 0, 1, 1], [], []>} : vector<32x144xbf16>, vector<144x128xbf16>, vector<32x128xf32> -> vector<32x128xf32>
    %15 = arith.maximumf %11, %14 : vector<32x128xf32>
    %c0_16 = arith.constant 0 : index
    %c0_17 = arith.constant 0 : index
    %16 = vector.load %arg7[%c0_16, %c0_17] : memref<32x1xf32, #tpu.memory_space<vmem>>, vector<32x1xf32>
    %17 = vector.broadcast %16 : vector<32x1xf32> to vector<32x128xf32>
    %18 = arith.addf %15, %17 : vector<32x128xf32>
    %cst_18 = arith.constant 0.000000e+00 : f32
    %19 = vector.broadcast %cst_18 : f32 to vector<32x128xf32>
    %20 = arith.maximumf %18, %19 : vector<32x128xf32>
    %21 = arith.truncf %20 : vector<32x128xf32> to vector<32x128xbf16>
    %c0_19 = arith.constant 0 : index
    %c0_20 = arith.constant 0 : index
    %c0_21 = arith.constant 0 : index
    %22 = vector.load %arg8[%c0_19, %c0_20, %c0_21] : memref<1x32x128xbf16, #tpu.memory_space<vmem>>, vector<1x32x128xbf16>
    %23 = vector.shape_cast %22 : vector<1x32x128xbf16> to vector<32x128xbf16>
    %24 = vector.shape_cast %21 : vector<32x128xbf16> to vector<1x32x128xbf16>
    tpu.vector_store %arg8[%c0_19, %c0_20, %c0_21], %24 {strides = array<i32>} : memref<1x32x128xbf16, #tpu.memory_space<vmem>>, vector<1x32x128xbf16>,
    return
  }
  func.func @transform_0(%arg0: i32, %arg1: i32) -> (i32, i32, i32) {
    %c0_i32 = arith.constant 0 : i32
    %c0_i32_0 = arith.constant 0 : i32
    return %arg0, %c0_i32, %arg1 : i32, i32, i32
  }
  func.func @transform_1(%arg0: i32, %arg1: i32) -> (i32, i32, i32) {
    %c0_i32 = arith.constant 0 : i32
    %c0_i32_0 = arith.constant 0 : i32
    return %arg0, %c0_i32, %arg1 : i32, i32, i32
  }
  func.func @transform_2(%arg0: i32, %arg1: i32) -> (i32, i32, i32) {
    %c0_i32 = arith.constant 0 : i32
    %c0_i32_0 = arith.constant 0 : i32
    return %arg0, %c0_i32, %arg1 : i32, i32, i32
  }
  func.func @transform_3(%arg0: i32, %arg1: i32) -> (i32, i32, i32) {
    %c0_i32 = arith.constant 0 : i32
    %c0_i32_0 = arith.constant 0 : i32
    return %arg0, %c0_i32, %arg1 : i32, i32, i32
  }
  func.func @transform_4(%arg0: i32, %arg1: i32) -> (i32, i32) {
    %c0_i32 = arith.constant 0 : i32
    %c0_i32_0 = arith.constant 0 : i32
    %c0_i32_1 = arith.constant 0 : i32
    return %c0_i32, %c0_i32_0 : i32, i32
  }
  func.func @transform_5(%arg0: i32, %arg1: i32) -> (i32, i32) {
    %c0_i32 = arith.constant 0 : i32
    %c0_i32_0 = arith.constant 0 : i32
    %c0_i32_1 = arith.constant 0 : i32
    return %c0_i32, %c0_i32_0 : i32, i32
  }
  func.func @transform_6(%arg0: i32, %arg1: i32) -> (i32, i32, i32) {
    %c0_i32 = arith.constant 0 : i32
    %c0_i32_0 = arith.constant 0 : i32
    return %arg0, %c0_i32, %arg1 : i32, i32, i32
  }
}

module attributes {stable_mosaic.version = 11 : i64} {
  func.func @_fc_fused_kernel(%arg0: i32, %arg1: memref<2x512xbf16, #tpu.memory_space<vmem>>, %arg2: memref<512x128xbf16, #tpu.memory_space<vmem>>, %arg3: memref<1x128xf32, #tpu.memory_space<vmem>>, %arg4: memref<128x4xbf16, #tpu.memory_space<vmem>>, %arg5: memref<1x4xf32, #tpu.memory_space<vmem>>, %arg6: memref<2x4xf32, #tpu.memory_space<vmem>>, %arg7: memref<2x128xf32, #tpu.memory_space<vmem>>) attributes {dimension_semantics = [#tpu.dimension_semantics<arbitrary>], iteration_bounds = array<i64: 1>, scalar_prefetch = 0 : i64, scratch_operands = 1 : i64, tpu.core_type = #tpu.core_type<tc>, window_params = [{transform_indices = @transform_0, window_bounds = array<i64: 2, 512>}, {transform_indices = @transform_1, window_bounds = array<i64: 512, 128>}, {pipeline_mode = #tpu.pipeline_mode<synchronous>, transform_indices = @transform_2, window_bounds = array<i64: 1, 128>}, {pipeline_mode = #tpu.pipeline_mode<synchronous>, transform_indices = @transform_3, window_bounds = array<i64: 128, 4>}, {pipeline_mode = #tpu.pipeline_mode<synchronous>, transform_indices = @transform_4, window_bounds = array<i64: 1, 4>}, {pipeline_mode = #tpu.pipeline_mode<synchronous>, transform_indices = @transform_5, window_bounds = array<i64: 2, 4>}]} {
    %c0_i32 = arith.constant 0 : i32
    %0 = arith.cmpi eq, %arg0, %c0_i32 : i32
    %1 = arith.extui %0 : i1 to i32
    %c0_i32_0 = arith.constant 0 : i32
    %2 = arith.cmpi ne, %1, %c0_i32_0 : i32
    scf.if %2 {
      %cst_10 = arith.constant 0.000000e+00 : f32
      %12 = vector.broadcast %cst_10 : f32 to vector<2x128xf32>
      %c0_11 = arith.constant 0 : index
      %c0_12 = arith.constant 0 : index
      %13 = vector.load %arg7[%c0_11, %c0_12] : memref<2x128xf32, #tpu.memory_space<vmem>>, vector<2x128xf32>
      tpu.vector_store %arg7[%c0_11, %c0_12], %12 {strides = array<i32>} : memref<2x128xf32, #tpu.memory_space<vmem>>, vector<2x128xf32>,
    } else {
    }
    %c0 = arith.constant 0 : index
    %c0_1 = arith.constant 0 : index
    %3 = vector.load %arg7[%c0, %c0_1] : memref<2x128xf32, #tpu.memory_space<vmem>>, vector<2x128xf32>
    %c0_2 = arith.constant 0 : index
    %c0_3 = arith.constant 0 : index
    %4 = vector.load %arg1[%c0_2, %c0_3] : memref<2x512xbf16, #tpu.memory_space<vmem>>, vector<2x512xbf16>
    %c0_4 = arith.constant 0 : index
    %c0_5 = arith.constant 0 : index
    %5 = vector.load %arg2[%c0_4, %c0_5] : memref<512x128xbf16, #tpu.memory_space<vmem>>, vector<512x128xbf16>
    %cst = arith.constant dense<0.000000e+00> : vector<2x128xf32>
    %6 = tpu.matmul %4, %5, %cst {dimension_numbers = #tpu.dot_dimension_numbers<[1], [0], [0], [1], [0, 0, 1, 1], [], []>} : vector<2x512xbf16>, vector<512x128xbf16>, vector<2x128xf32> -> vector<2x128xf32>
    %7 = arith.addf %3, %6 : vector<2x128xf32>
    %c0_6 = arith.constant 0 : index
    %c0_7 = arith.constant 0 : index
    %8 = vector.load %arg7[%c0_6, %c0_7] : memref<2x128xf32, #tpu.memory_space<vmem>>, vector<2x128xf32>
    tpu.vector_store %arg7[%c0_6, %c0_7], %7 {strides = array<i32>} : memref<2x128xf32, #tpu.memory_space<vmem>>, vector<2x128xf32>,
    %c0_i32_8 = arith.constant 0 : i32
    %9 = arith.cmpi eq, %arg0, %c0_i32_8 : i32
    %10 = arith.extui %9 : i1 to i32
    %c0_i32_9 = arith.constant 0 : i32
    %11 = arith.cmpi ne, %10, %c0_i32_9 : i32
    scf.if %11 {
      %c0_10 = arith.constant 0 : index
      %c0_11 = arith.constant 0 : index
      %12 = vector.load %arg7[%c0_10, %c0_11] : memref<2x128xf32, #tpu.memory_space<vmem>>, vector<2x128xf32>
      %c0_12 = arith.constant 0 : index
      %c0_13 = arith.constant 0 : index
      %13 = vector.load %arg3[%c0_12, %c0_13] : memref<1x128xf32, #tpu.memory_space<vmem>>, vector<1x128xf32>
      %14 = vector.broadcast %13 : vector<1x128xf32> to vector<2x128xf32>
      %15 = arith.addf %12, %14 : vector<2x128xf32>
      %cst_14 = arith.constant 0.000000e+00 : f32
      %16 = vector.broadcast %cst_14 : f32 to vector<2x128xf32>
      %17 = arith.maximumf %15, %16 : vector<2x128xf32>
      %18 = arith.truncf %17 : vector<2x128xf32> to vector<2x128xbf16>
      %c0_15 = arith.constant 0 : index
      %c0_16 = arith.constant 0 : index
      %19 = vector.load %arg4[%c0_15, %c0_16] : memref<128x4xbf16, #tpu.memory_space<vmem>>, vector<128x4xbf16>
      %cst_17 = arith.constant dense<0.000000e+00> : vector<2x4xf32>
      %20 = tpu.matmul %18, %19, %cst_17 {dimension_numbers = #tpu.dot_dimension_numbers<[1], [0], [0], [1], [0, 0, 1, 1], [], []>} : vector<2x128xbf16>, vector<128x4xbf16>, vector<2x4xf32> -> vector<2x4xf32>
      %c0_18 = arith.constant 0 : index
      %c0_19 = arith.constant 0 : index
      %21 = vector.load %arg5[%c0_18, %c0_19] : memref<1x4xf32, #tpu.memory_space<vmem>>, vector<1x4xf32>
      %22 = vector.broadcast %21 : vector<1x4xf32> to vector<2x4xf32>
      %23 = arith.addf %20, %22 : vector<2x4xf32>
      %c0_20 = arith.constant 0 : index
      %c0_21 = arith.constant 0 : index
      %24 = vector.load %arg6[%c0_20, %c0_21] : memref<2x4xf32, #tpu.memory_space<vmem>>, vector<2x4xf32>
      tpu.vector_store %arg6[%c0_20, %c0_21], %23 {strides = array<i32>} : memref<2x4xf32, #tpu.memory_space<vmem>>, vector<2x4xf32>,
    } else {
    }
    return
  }
  func.func @transform_0(%arg0: i32) -> (i32, i32) {
    %c0_i32 = arith.constant 0 : i32
    %c0_i32_0 = arith.constant 0 : i32
    return %c0_i32, %arg0 : i32, i32
  }
  func.func @transform_1(%arg0: i32) -> (i32, i32) {
    %c0_i32 = arith.constant 0 : i32
    %c0_i32_0 = arith.constant 0 : i32
    return %arg0, %c0_i32 : i32, i32
  }
  func.func @transform_2(%arg0: i32) -> (i32, i32) {
    %c0_i32 = arith.constant 0 : i32
    %c0_i32_0 = arith.constant 0 : i32
    %c0_i32_1 = arith.constant 0 : i32
    return %c0_i32, %c0_i32_0 : i32, i32
  }
  func.func @transform_3(%arg0: i32) -> (i32, i32) {
    %c0_i32 = arith.constant 0 : i32
    %c0_i32_0 = arith.constant 0 : i32
    %c0_i32_1 = arith.constant 0 : i32
    return %c0_i32, %c0_i32_0 : i32, i32
  }
  func.func @transform_4(%arg0: i32) -> (i32, i32) {
    %c0_i32 = arith.constant 0 : i32
    %c0_i32_0 = arith.constant 0 : i32
    %c0_i32_1 = arith.constant 0 : i32
    return %c0_i32, %c0_i32_0 : i32, i32
  }
  func.func @transform_5(%arg0: i32) -> (i32, i32) {
    %c0_i32 = arith.constant 0 : i32
    %c0_i32_0 = arith.constant 0 : i32
    %c0_i32_1 = arith.constant 0 : i32
    return %c0_i32, %c0_i32_0 : i32, i32
  }
}

</mosaic_0001>

<llo_original>
// kernel: screen_action_net.3
$region0: #{screen_action_net.3}
  #allocation0 [shape = 'u32[]', space=smem, size = 0x4, offset = 0x4, fixed_abs, tag = 'smem constant byte address 0x4 - core index']
  #allocation1 [shape = 'u32[144,128]{1,0:T(1,128)}', space=vmem, size = 0x12000, scoped, tag = 'internal scratch']
  %s0 = inlined_call_operand.vmem [shape: bf16[2,27,128], index: 0, kind: input, shape index: {}]
  %s1 = inlined_call_operand.vmem [shape: bf16[2,27,128], index: 1, kind: input, shape index: {}]
  %s2 = inlined_call_operand.vmem [shape: bf16[2,27,128], index: 2, kind: input, shape index: {}]
  %s3 = inlined_call_operand.vmem [shape: bf16[2,27,128], index: 3, kind: input, shape index: {}]
  %s4 = inlined_call_operand.vmem [shape: bf16[16,27], index: 4, kind: input, shape index: {}]
  %s5 = inlined_call_operand.vmem [shape: f32[16,1], index: 5, kind: input, shape index: {}]
  %s6 = inlined_call_operand.vmem [shape: bf16[2,16,128], index: 6, kind: output, shape index: {}]
  %s7 = sld [smem:[#allocation0]]
  $region57: #{screen_action_net.3} parent=0
    _
  %s9 = ssub.s32 1, %s7
  %s10 = scalar_select 0, %s9, %s7
  loop: start=0, step=1, limit=4
  $region2: #{screen_action_net.3} parent=0 // loop_pre_header
    _
  $region3: #{screen_action_net.3} parent=0 // loop_header
    %s12 = sphi 0, %s16
    %p13 = scmp.ge.s32.totalorder %s12, 4
    %s19 = sphi 0, %s31
    %s20 = sphi 0, %s27
    %s21 = sphi 0, %s19
    %s22 = sphi 0, %s20
    %s23 = sphi 0, %s21
    %s24 = sphi 0, %s22
    %s36 = sphi 0, %s38
    %s39 = sphi 0, %s36
    %s40 = sphi 0, %s39
    %s56 = sphi 0, %s40
    %s64 = sphi 0, %s66
    %s67 = sphi 0, %s64
    %s68 = sphi 0, %s67
    %s84 = sphi 0, %s68
    %s92 = sphi 0, %s94
    %s95 = sphi 0, %s92
    %s96 = sphi 0, %s95
    %s112 = sphi 0, %s96
    %s120 = sphi 0, %s122
    %s123 = sphi 0, %s120
    %s124 = sphi 0, %s123
    %s140 = sphi 0, %s124
    %s144 = sphi 0, %s144
    %s146 = sphi 0, %s144
    %s147 = sphi 0, %s146
    %s161 = sphi 0, %s147
    %s165 = sphi 0, %s165
    %s167 = sphi 0, %s165
    %s168 = sphi 0, %s167
    %s182 = sphi 0, %s168
    %s190 = sphi 0, %s192
    %s193 = sphi 0, %s190
    %s194 = sphi 0, %s193
    %s210 = sphi 0, %s194
  $region4: #{screen_action_net.3} parent=0 // loop_header_branch
    %15 = sbr.rel (%p13) target = $region8
  $region5: #{screen_action_net.3} parent=0 // loop_body
    %s17 = ssub.s32 %s12, 1
    %s18 = ssub.s32 %s12, 2
    %s25 = sadd.s32 1, %s20
    %p26 = scmp.ge.s32.totalorder %s25, 1
    %s27 = scalar_select %p26, 0, %s25
    %s28 = sadd.s32 1, %s19
    %s29 = scalar_select %p26, %s28, %s19
    %p30 = scmp.ge.s32.totalorder %s29, 2
    %s31 = scalar_select %p30, 0, %s29
    %s32 = ssub.s32 %s19, %s31
    %s33 = ssub.s32 %s20, %s27
    %s34 = sor.u32 %s32, %s33
    %p35 = scmp.eq.s32.totalorder %s34, 0
    %s37 = sadd.s32 %s36, 1
    %s38 = scalar_select %p35, %s36, %s37
    %p41 = pneg %p35
    %p42 = scmp.eq.s32.totalorder %s12, 1
    %p43 = por %p41, %p42
    %p44 = scmp.ne.s32.totalorder %s36, %s39
    %p45 = scmp.eq.s32.totalorder %s12, 0
    %p46 = por %p44, %p45
    %p47 = scmp.ne.s32.totalorder %s36, %s39
    %p48 = scmp.eq.s32.totalorder %s17, 1
    %p49 = por %p47, %p48
    %p50 = scmp.ne.s32.totalorder %s39, %s40
    %p51 = scmp.eq.s32.totalorder %s17, 0
    %p52 = por %p50, %p51
    %p53 = scmp.ne.s32.totalorder %s39, %s40
    %p54 = scmp.eq.s32.totalorder %s18, 1
    %p55 = por %p53, %p54
    %p57 = scmp.ne.s32.totalorder %s40, %s56
    %p58 = scmp.eq.s32.totalorder %s18, 0
    %p59 = por %p57, %p58
    %s60 = ssub.s32 %s19, %s31
    %s61 = ssub.s32 %s20, %s27
    %s62 = sor.u32 %s60, %s61
    %p63 = scmp.eq.s32.totalorder %s62, 0
    %s65 = sadd.s32 %s64, 1
    %s66 = scalar_select %p63, %s64, %s65
    %p69 = pneg %p63
    %p70 = scmp.eq.s32.totalorder %s12, 1
    %p71 = por %p69, %p70
    %p72 = scmp.ne.s32.totalorder %s64, %s67
    %p73 = scmp.eq.s32.totalorder %s12, 0
    %p74 = por %p72, %p73
    %p75 = scmp.ne.s32.totalorder %s64, %s67
    %p76 = scmp.eq.s32.totalorder %s17, 1
    %p77 = por %p75, %p76
    %p78 = scmp.ne.s32.totalorder %s67, %s68
    %p79 = scmp.eq.s32.totalorder %s17, 0
    %p80 = por %p78, %p79
    %p81 = scmp.ne.s32.totalorder %s67, %s68
    %p82 = scmp.eq.s32.totalorder %s18, 1
    %p83 = por %p81, %p82
    %p85 = scmp.ne.s32.totalorder %s68, %s84
    %p86 = scmp.eq.s32.totalorder %s18, 0
    %p87 = por %p85, %p86
    %s88 = ssub.s32 %s19, %s31
    %s89 = ssub.s32 %s20, %s27
    %s90 = sor.u32 %s88, %s89
    %p91 = scmp.eq.s32.totalorder %s90, 0
    %s93 = sadd.s32 %s92, 1
    %s94 = scalar_select %p91, %s92, %s93
    %p97 = pneg %p91
    %p98 = scmp.eq.s32.totalorder %s12, 1
    %p99 = por %p97, %p98
    %p100 = scmp.ne.s32.totalorder %s92, %s95
    %p101 = scmp.eq.s32.totalorder %s12, 0
    %p102 = por %p100, %p101
    %p103 = scmp.ne.s32.totalorder %s92, %s95
    %p104 = scmp.eq.s32.totalorder %s17, 1
    %p105 = por %p103, %p104
    %p106 = scmp.ne.s32.totalorder %s95, %s96
    %p107 = scmp.eq.s32.totalorder %s17, 0
    %p108 = por %p106, %p107
    %p109 = scmp.ne.s32.totalorder %s95, %s96
    %p110 = scmp.eq.s32.totalorder %s18, 1
    %p111 = por %p109, %p110
    %p113 = scmp.ne.s32.totalorder %s96, %s112
    %p114 = scmp.eq.s32.totalorder %s18, 0
    %p115 = por %p113, %p114
    %s116 = ssub.s32 %s19, %s31
    %s117 = ssub.s32 %s20, %s27
    %s118 = sor.u32 %s116, %s117
    %p119 = scmp.eq.s32.totalorder %s118, 0
    %s121 = sadd.s32 %s120, 1
    %s122 = scalar_select %p119, %s120, %s121
    %p125 = pneg %p119
    %p126 = scmp.eq.s32.totalorder %s12, 1
    %p127 = por %p125, %p126
    %p128 = scmp.ne.s32.totalorder %s120, %s123
    %p129 = scmp.eq.s32.totalorder %s12, 0
    %p130 = por %p128, %p129
    %p131 = scmp.ne.s32.totalorder %s120, %s123
    %p132 = scmp.eq.s32.totalorder %s17, 1
    %p133 = por %p131, %p132
    %p134 = scmp.ne.s32.totalorder %s123, %s124
    %p135 = scmp.eq.s32.totalorder %s17, 0
    %p136 = por %p134, %p135
    %p137 = scmp.ne.s32.totalorder %s123, %s124
    %p138 = scmp.eq.s32.totalorder %s18, 1
    %p139 = por %p137, %p138
    %p141 = scmp.ne.s32.totalorder %s124, %s140
    %p142 = scmp.eq.s32.totalorder %s18, 0
    %p143 = por %p141, %p142
    %s145 = sadd.s32 %s144, 1
    %p148 = scmp.eq.s32.totalorder %s12, 1
    %p149 = scmp.ne.s32.totalorder %s144, %s146
    %p150 = scmp.eq.s32.totalorder %s12, 0
    %p151 = por %p149, %p150
    %p152 = scmp.ne.s32.totalorder %s144, %s146
    %p153 = scmp.eq.s32.totalorder %s17, 1
    %p154 = por %p152, %p153
    %p155 = scmp.ne.s32.totalorder %s146, %s147
    %p156 = scmp.eq.s32.totalorder %s17, 0
    %p157 = por %p155, %p156
    %p158 = scmp.ne.s32.totalorder %s146, %s147
    %p159 = scmp.eq.s32.totalorder %s18, 1
    %p160 = por %p158, %p159
    %p162 = scmp.ne.s32.totalorder %s147, %s161
    %p163 = scmp.eq.s32.totalorder %s18, 0
    %p164 = por %p162, %p163
    %s166 = sadd.s32 %s165, 1
    %p169 = scmp.eq.s32.totalorder %s12, 1
    %p170 = scmp.ne.s32.totalorder %s165, %s167
    %p171 = scmp.eq.s32.totalorder %s12, 0
    %p172 = por %p170, %p171
    %p173 = scmp.ne.s32.totalorder %s165, %s167
    %p174 = scmp.eq.s32.totalorder %s17, 1
    %p175 = por %p173, %p174
    %p176 = scmp.ne.s32.totalorder %s167, %s168
    %p177 = scmp.eq.s32.totalorder %s17, 0
    %p178 = por %p176, %p177
    %p179 = scmp.ne.s32.totalorder %s167, %s168
    %p180 = scmp.eq.s32.totalorder %s18, 1
    %p181 = por %p179, %p180
    %p183 = scmp.ne.s32.totalorder %s168, %s182
    %p184 = scmp.eq.s32.totalorder %s18, 0
    %p185 = por %p183, %p184
    %s186 = ssub.s32 %s19, %s31
    %s187 = ssub.s32 %s20, %s27
    %s188 = sor.u32 %s186, %s187
    %p189 = scmp.eq.s32.totalorder %s188, 0
    %s191 = sadd.s32 %s190, 1
    %s192 = scalar_select %p189, %s190, %s191
    %p195 = pneg %p189
    %p196 = scmp.eq.s32.totalorder %s12, 1
    %p197 = por %p195, %p196
    %p198 = scmp.ne.s32.totalorder %s190, %s193
    %p199 = scmp.eq.s32.totalorder %s12, 0
    %p200 = por %p198, %p199
    %p201 = scmp.ne.s32.totalorder %s190, %s193
    %p202 = scmp.eq.s32.totalorder %s17, 1
    %p203 = por %p201, %p202
    %p204 = scmp.ne.s32.totalorder %s193, %s194
    %p205 = scmp.eq.s32.totalorder %s17, 0
    %p206 = por %p204, %p205
    %p207 = scmp.ne.s32.totalorder %s193, %s194
    %p208 = scmp.eq.s32.totalorder %s18, 1
    %p209 = por %p207, %p208
    %p211 = scmp.ne.s32.totalorder %s194, %s210
    %p212 = scmp.eq.s32.totalorder %s18, 0
    %p213 = por %p211, %p212
    %p214 = scmp.le.s32.totalorder 1, %s12
    %p215 = scmp.lt.s32.totalorder %s12, 3
    %p216 = pnand %p214, %p215
    %p217 = pneg %p216
    // Predicated region
    $region9: #{screen_action_net.3} parent=5 // pred_check
      _
    $region10: #{screen_action_net.3} parent=5 // pred_check_branch
      %219 = sbr.rel (%p216) target = $region12
    $region11: #{screen_action_net.3} parent=5 // pred_region
      %s220 = ssub.s32 %s12, 1
      // Predicated region
      $region13: #{screen_action_net.3} parent=11 // pred_check
        %p221 = pneg %p157
      $region14: #{screen_action_net.3} parent=11 // pred_check_branch
        %223 = sbr.rel (%p221) target = $region16
      $region15: #{screen_action_net.3} parent=11 // pred_region
        _
      $region16: #{screen_action_net.3} parent=11 // pred_fallthru
        _
      // Predicated region
      $region17: #{screen_action_net.3} parent=11 // pred_check
        %p224 = pneg %p178
      $region18: #{screen_action_net.3} parent=11 // pred_check_branch
        %226 = sbr.rel (%p224) target = $region20
      $region19: #{screen_action_net.3} parent=11 // pred_region
        _
      $region20: #{screen_action_net.3} parent=11 // pred_fallthru
        _
    $region12: #{screen_action_net.3} parent=5 // pred_fallthru
      _
    %p227 = scmp.lt.s32.totalorder %s12, 2
    // Predicated region
    $region21: #{screen_action_net.3} parent=5 // pred_check
      %p228 = pneg %p227
    $region22: #{screen_action_net.3} parent=5 // pred_check_branch
      %230 = sbr.rel (%p228) target = $region24
    $region23: #{screen_action_net.3} parent=5 // pred_region
      // Predicated region
      $region25: #{screen_action_net.3} parent=23 // pred_check
        %p231 = pneg %p46
      $region26: #{screen_action_net.3} parent=23 // pred_check_branch
        %233 = sbr.rel (%p231) target = $region28
      $region27: #{screen_action_net.3} parent=23 // pred_region
        %p234 = scmp.lt.s32.totalorder %s19, 1
        %s235 = scalar_select %p234, %s19, 1
        %p236 = scmp.lt.s32.totalorder %s20, 0
        %s237 = scalar_select %p236, %s20, 0
        %s238 = smul.addr %s235, 4
        %s239 = sadd.s32 %s237, %s238
        %s240 = smul.addr %s239, 4
        %s241 = scalar_lea.vmem %s0, %s240
      $region28: #{screen_action_net.3} parent=23 // pred_fallthru
        _
      // Predicated region
      $region29: #{screen_action_net.3} parent=23 // pred_check
        %p242 = pneg %p74
      $region30: #{screen_action_net.3} parent=23 // pred_check_branch
        %244 = sbr.rel (%p242) target = $region32
      $region31: #{screen_action_net.3} parent=23 // pred_region
        %p245 = scmp.lt.s32.totalorder %s19, 1
        %s246 = scalar_select %p245, %s19, 1
        %p247 = scmp.lt.s32.totalorder %s20, 0
        %s248 = scalar_select %p247, %s20, 0
        %s249 = smul.addr %s246, 4
        %s250 = sadd.s32 %s248, %s249
        %s251 = smul.addr %s250, 4
        %s252 = scalar_lea.vmem %s1, %s251
      $region32: #{screen_action_net.3} parent=23 // pred_fallthru
        _
      // Predicated region
      $region33: #{screen_action_net.3} parent=23 // pred_check
        %p253 = pneg %p102
      $region34: #{screen_action_net.3} parent=23 // pred_check_branch
        %255 = sbr.rel (%p253) target = $region36
      $region35: #{screen_action_net.3} parent=23 // pred_region
        %p256 = scmp.lt.s32.totalorder %s19, 1
        %s257 = scalar_select %p256, %s19, 1
        %p258 = scmp.lt.s32.totalorder %s20, 0
        %s259 = scalar_select %p258, %s20, 0
        %s260 = smul.addr %s257, 4
        %s261 = sadd.s32 %s259, %s260
        %s262 = smul.addr %s261, 4
        %s263 = scalar_lea.vmem %s2, %s262
      $region36: #{screen_action_net.3} parent=23 // pred_fallthru
        _
      // Predicated region
      $region37: #{screen_action_net.3} parent=23 // pred_check
        %p264 = pneg %p130
      $region38: #{screen_action_net.3} parent=23 // pred_check_branch
        %266 = sbr.rel (%p264) target = $region40
      $region39: #{screen_action_net.3} parent=23 // pred_region
        %p267 = scmp.lt.s32.totalorder %s19, 1
        %s268 = scalar_select %p267, %s19, 1
        %p269 = scmp.lt.s32.totalorder %s20, 0
        %s270 = scalar_select %p269, %s20, 0
        %s271 = smul.addr %s268, 4
        %s272 = sadd.s32 %s270, %s271
        %s273 = smul.addr %s272, 4
        %s274 = scalar_lea.vmem %s3, %s273
      $region40: #{screen_action_net.3} parent=23 // pred_fallthru
        _
    $region24: #{screen_action_net.3} parent=5 // pred_fallthru
      _
    %p275 = scmp.le.s32.totalorder 1, %s12
    %p276 = scmp.lt.s32.totalorder %s12, 3
    %p277 = pnand %p275, %p276
    %p278 = pneg %p277
    // Predicated region
    $region41: #{screen_action_net.3} parent=5 // pred_check
      _
    $region42: #{screen_action_net.3} parent=5 // pred_check_branch
      %280 = sbr.rel (%p277) target = $region44
    $region43: #{screen_action_net.3} parent=5 // pred_region
      %s281 = ssub.s32 %s12, 1
      %p282 = scmp.lt.s32.totalorder %s21, 1
      %s283 = scalar_select %p282, %s21, 1
      %p284 = scmp.lt.s32.totalorder %s22, 0
      %s285 = scalar_select %p284, %s22, 0
      %s286 = smul.addr %s283, 4
      %s287 = sadd.s32 %s285, %s286
      %s288 = smul.addr %s287, 4
      %s289 = scalar_lea.vmem %s0, %s288
      %p290 = pneg %p52
      %p291 = pneg %p49
      %p292 = scmp.lt.s32.totalorder %s21, 1
      %s293 = scalar_select %p292, %s21, 1
      %p294 = scmp.lt.s32.totalorder %s22, 0
      %s295 = scalar_select %p294, %s22, 0
      %s296 = smul.addr %s293, 4
      %s297 = sadd.s32 %s295, %s296
      %s298 = smul.addr %s297, 4
      %s299 = scalar_lea.vmem %s1, %s298
      %p300 = pneg %p80
      %p301 = pneg %p77
      %p302 = scmp.lt.s32.totalorder %s21, 1
      %s303 = scalar_select %p302, %s21, 1
      %p304 = scmp.lt.s32.totalorder %s22, 0
      %s305 = scalar_select %p304, %s22, 0
      %s306 = smul.addr %s303, 4
      %s307 = sadd.s32 %s305, %s306
      %s308 = smul.addr %s307, 4
      %s309 = scalar_lea.vmem %s2, %s308
      %p310 = pneg %p108
      %p311 = pneg %p105
      %p312 = scmp.lt.s32.totalorder %s21, 1
      %s313 = scalar_select %p312, %s21, 1
      %p314 = scmp.lt.s32.totalorder %s22, 0
      %s315 = scalar_select %p314, %s22, 0
      %s316 = smul.addr %s313, 4
      %s317 = sadd.s32 %s315, %s316
      %s318 = smul.addr %s317, 4
      %s319 = scalar_lea.vmem %s3, %s318
      %p320 = pneg %p136
      %p321 = pneg %p133
      %p322 = pneg %p157
      %p323 = pneg %p154
      %p324 = pneg %p178
      %p325 = pneg %p175
      %p326 = pneg %p206
      %p327 = pneg %p203
      %p328 = scmp.lt.s32.totalorder %s21, 1
      %s329 = scalar_select %p328, %s21, 1
      %p330 = scmp.lt.s32.totalorder %s22, 0
      %s331 = scalar_select %p330, %s22, 0
      %s332 = smul.addr %s329, 2
      %s333 = sadd.s32 %s331, %s332
      %s334 = smul.addr %s333, 4
      %s335 = scalar_lea.vmem %s6, %s334
      %p336 = scmp.lt.s32.totalorder %s21, 1
      %s337 = scalar_select %p336, %s21, 1
      %p338 = scmp.lt.s32.totalorder %s22, 0
      %s339 = scalar_select %p338, %s22, 0
      %s340 = smul.addr %s337, 4
      %s341 = sadd.s32 %s339, %s340
      %s342 = smul.addr %s341, 4
      %s343 = scalar_lea.vmem %s0, %s342
      %p344 = scmp.lt.s32.totalorder %s21, 1
      %s345 = scalar_select %p344, %s21, 1
      %p346 = scmp.lt.s32.totalorder %s22, 0
      %s347 = scalar_select %p346, %s22, 0
      %s348 = smul.addr %s345, 4
      %s349 = sadd.s32 %s347, %s348
      %s350 = smul.addr %s349, 4
      %s351 = scalar_lea.vmem %s1, %s350
      %p352 = scmp.lt.s32.totalorder %s21, 1
      %s353 = scalar_select %p352, %s21, 1
      %p354 = scmp.lt.s32.totalorder %s22, 0
      %s355 = scalar_select %p354, %s22, 0
      %s356 = smul.addr %s353, 4
      %s357 = sadd.s32 %s355, %s356
      %s358 = smul.addr %s357, 4
      %s359 = scalar_lea.vmem %s2, %s358
      %p360 = scmp.lt.s32.totalorder %s21, 1
      %s361 = scalar_select %p360, %s21, 1
      %p362 = scmp.lt.s32.totalorder %s22, 0
      %s363 = scalar_select %p362, %s22, 0
      %s364 = smul.addr %s361, 4
      %s365 = sadd.s32 %s363, %s364
      %s366 = smul.addr %s365, 4
      %s367 = scalar_lea.vmem %s3, %s366
      %p368 = scmp.lt.s32.totalorder %s21, 1
      %s369 = scalar_select %p368, %s21, 1
      %p370 = scmp.lt.s32.totalorder %s22, 0
      %s371 = scalar_select %p370, %s22, 0
      %s372 = smul.addr %s369, 2
      %s373 = sadd.s32 %s371, %s372
      %s374 = smul.addr %s373, 4
      %s375 = scalar_lea.vmem %s6, %s374
      %v377 = vld [vmem:[%s4] sm:$0xf]
      %v378 = vld [vmem:[%s4 + $0x4] sm:$0xf]
      %v379 = vld [vmem:[%s343] sm:$0xf]
      %v380 = vld [vmem:[%s343 + $0x4] sm:$0xf]
      %v381 = vld [vmem:[%s343 + $0x8] sm:$0xf]
      %v382 = vld [vmem:[%s343 + $0xc] sm:$0x3]
      %v385 = vunpack.c.l.b16 %v377
      %v386 = vunpack.c.l.b16 %v378
      %v387 = vpack.c.b16 %v386, %v385
      %v392 = vunpack.c.l.b16 %v379
      %v393 = vunpack.c.l.b16 %v380
      %v394 = vunpack.c.l.b16 %v381
      %v395 = vunpack.c.l.b16 %v382
      %v396 = vpack.c.b16 %v393, %v392
      %v397 = vpack.c.b16 %v395, %v394
      %vm399 = vcmask 220160
      %v401 = vsel %vm399, %v387, 0
      %vm403 = vcmask 1044480
      %vm404 = vcmask 1045504
      %v405 = vsel %vm403, 4294967295, 65535
      %v406 = vsel %vm404, %v405, 0
      %v408 = vand.u32 %v397, %v406
      %410 = vmatprep.subr.bf16.mxu0 0
      %411 = vmatpush1.bf16.msra.mxu0 %v396
      %412 = vmatprep.subr.bf16.mxu0 0
      %413 = vmatpush1.bf16.msra.mxu0 %v408
      %414 = vmatprep.subr.bf16.mxu0 0
      %415 = vmatpush1.bf16.msra.mxu0 0
      %416 = vmatprep.subr.bf16.mxu0 0
      %417 = vmatpush1.bf16.msra.mxu0 0
      %418 = vmatprep.subr.bf16.mxu0 0
      %419 = vmatpush1.bf16.msra.mxu0 0
      %420 = vmatprep.subr.bf16.mxu0 0
      %421 = vmatpush1.bf16.msra.mxu0 0
      %422 = vmatprep.subr.bf16.mxu0 0
      %423 = vmatpush1.bf16.msra.mxu0 0
      %424 = vmatprep.subr.bf16.mxu0 0
      %425 = vmatpush1.bf16.msra.mxu0 0
      %426 = vmatprep.subr.bf16.mxu0 0
      %427 = vmatpush1.bf16.msra.mxu0 0
      %428 = vmatprep.subr.bf16.mxu0 0
      %429 = vmatpush1.bf16.msra.mxu0 0
      %430 = vmatprep.subr.bf16.mxu0 0
      %431 = vmatpush1.bf16.msra.mxu0 0
      %432 = vmatprep.subr.bf16.mxu0 0
      %433 = vmatpush1.bf16.msra.mxu0 0
      %434 = vmatprep.subr.bf16.mxu0 0
      %435 = vmatpush1.bf16.msra.mxu0 0
      %436 = vmatprep.subr.bf16.mxu0 0
      %437 = vmatpush1.bf16.msra.mxu0 0
      %438 = vmatprep.subr.bf16.mxu0 0
      %439 = vmatpush1.bf16.msra.mxu0 0
      %440 = vmatprep.subr.bf16.mxu0 0
      %441 = vmatpush1.bf16.msra.mxu0 0
      %442 = vmatprep.mubr.bf16.mxu0 0
      %443 = vmatmul.mubr.bf16.gmra.mrb[0].mxu0 %v401
      %v444 = vpop.f32.mrb[0].mxu0
      %v445 = vadd.f32 0.0, %v444
      %v446 = vpop.f32.mrb[0].mxu0
      %v447 = vpop.f32.mrb[0].mxu0
      %v448 = vadd.f32 0.0, %v447
      %v449 = vpop.f32.mrb[0].mxu0
      %450 = vdwg.mxu0
      %v451 = vld [vmem:[%s351] sm:$0xf]
      %v452 = vld [vmem:[%s351 + $0x4] sm:$0xf]
      %v453 = vld [vmem:[%s351 + $0x8] sm:$0xf]
      %v454 = vld [vmem:[%s351 + $0xc] sm:$0x3]
      %v459 = vunpack.c.l.b16 %v451
      %v460 = vunpack.c.l.b16 %v452
      %v461 = vunpack.c.l.b16 %v453
      %v462 = vunpack.c.l.b16 %v454
      %v463 = vpack.c.b16 %v460, %v459
      %v464 = vpack.c.b16 %v462, %v461
      %v467 = vand.u32 %v464, %v406
      %469 = vmatprep.subr.bf16.mxu0 0
      %470 = vmatpush1.bf16.msra.mxu0 %v463
      %471 = vmatprep.subr.bf16.mxu0 0
      %472 = vmatpush1.bf16.msra.mxu0 %v467
      %473 = vmatprep.subr.bf16.mxu0 0
      %474 = vmatpush1.bf16.msra.mxu0 0
      %475 = vmatprep.subr.bf16.mxu0 0
      %476 = vmatpush1.bf16.msra.mxu0 0
      %477 = vmatprep.subr.bf16.mxu0 0
      %478 = vmatpush1.bf16.msra.mxu0 0
      %479 = vmatprep.subr.bf16.mxu0 0
      %480 = vmatpush1.bf16.msra.mxu0 0
      %481 = vmatprep.subr.bf16.mxu0 0
      %482 = vmatpush1.bf16.msra.mxu0 0
      %483 = vmatprep.subr.bf16.mxu0 0
      %484 = vmatpush1.bf16.msra.mxu0 0
      %485 = vmatprep.subr.bf16.mxu0 0
      %486 = vmatpush1.bf16.msra.mxu0 0
      %487 = vmatprep.subr.bf16.mxu0 0
      %488 = vmatpush1.bf16.msra.mxu0 0
      %489 = vmatprep.subr.bf16.mxu0 0
      %490 = vmatpush1.bf16.msra.mxu0 0
      %491 = vmatprep.subr.bf16.mxu0 0
      %492 = vmatpush1.bf16.msra.mxu0 0
      %493 = vmatprep.subr.bf16.mxu0 0
      %494 = vmatpush1.bf16.msra.mxu0 0
      %495 = vmatprep.subr.bf16.mxu0 0
      %496 = vmatpush1.bf16.msra.mxu0 0
      %497 = vmatprep.subr.bf16.mxu0 0
      %498 = vmatpush1.bf16.msra.mxu0 0
      %499 = vmatprep.subr.bf16.mxu0 0
      %500 = vmatpush1.bf16.msra.mxu0 0
      %501 = vmatprep.mubr.bf16.mxu0 0
      %502 = vmatmul.mubr.bf16.gmra.mrb[0].mxu0 %v401
      %v503 = vpop.f32.mrb[0].mxu0
      %v504 = vadd.f32 0.0, %v503
      %v505 = vpop.f32.mrb[0].mxu0
      %v506 = vpop.f32.mrb[0].mxu0
      %v507 = vadd.f32 0.0, %v506
      %v508 = vpop.f32.mrb[0].mxu0
      %509 = vdwg.mxu0
      %v510 = vmax.f32 %v445, %v504
      %v511 = vmax.f32 %v448, %v507
      %v512 = vld [vmem:[%s359] sm:$0xf]
      %v513 = vld [vmem:[%s359 + $0x4] sm:$0xf]
      %v514 = vld [vmem:[%s359 + $0x8] sm:$0xf]
      %v515 = vld [vmem:[%s359 + $0xc] sm:$0x3]
      %v520 = vunpack.c.l.b16 %v512
      %v521 = vunpack.c.l.b16 %v513
      %v522 = vunpack.c.l.b16 %v514
      %v523 = vunpack.c.l.b16 %v515
      %v524 = vpack.c.b16 %v521, %v520
      %v525 = vpack.c.b16 %v523, %v522
      %v528 = vand.u32 %v525, %v406
      %530 = vmatprep.subr.bf16.mxu0 0
      %531 = vmatpush1.bf16.msra.mxu0 %v524
      %532 = vmatprep.subr.bf16.mxu0 0
      %533 = vmatpush1.bf16.msra.mxu0 %v528
      %534 = vmatprep.subr.bf16.mxu0 0
      %535 = vmatpush1.bf16.msra.mxu0 0
      %536 = vmatprep.subr.bf16.mxu0 0
      %537 = vmatpush1.bf16.msra.mxu0 0
      %538 = vmatprep.subr.bf16.mxu0 0
      %539 = vmatpush1.bf16.msra.mxu0 0
      %540 = vmatprep.subr.bf16.mxu0 0
      %541 = vmatpush1.bf16.msra.mxu0 0
      %542 = vmatprep.subr.bf16.mxu0 0
      %543 = vmatpush1.bf16.msra.mxu0 0
      %544 = vmatprep.subr.bf16.mxu0 0
      %545 = vmatpush1.bf16.msra.mxu0 0
      %546 = vmatprep.subr.bf16.mxu0 0
      %547 = vmatpush1.bf16.msra.mxu0 0
      %548 = vmatprep.subr.bf16.mxu0 0
      %549 = vmatpush1.bf16.msra.mxu0 0
      %550 = vmatprep.subr.bf16.mxu0 0
      %551 = vmatpush1.bf16.msra.mxu0 0
      %552 = vmatprep.subr.bf16.mxu0 0
      %553 = vmatpush1.bf16.msra.mxu0 0
      %554 = vmatprep.subr.bf16.mxu0 0
      %555 = vmatpush1.bf16.msra.mxu0 0
      %556 = vmatprep.subr.bf16.mxu0 0
      %557 = vmatpush1.bf16.msra.mxu0 0
      %558 = vmatprep.subr.bf16.mxu0 0
      %559 = vmatpush1.bf16.msra.mxu0 0
      %560 = vmatprep.subr.bf16.mxu0 0
      %561 = vmatpush1.bf16.msra.mxu0 0
      %562 = vmatprep.mubr.bf16.mxu0 0
      %563 = vmatmul.mubr.bf16.gmra.mrb[0].mxu0 %v401
      %v564 = vpop.f32.mrb[0].mxu0
      %v565 = vadd.f32 0.0, %v564
      %v566 = vpop.f32.mrb[0].mxu0
      %v567 = vpop.f32.mrb[0].mxu0
      %v568 = vadd.f32 0.0, %v567
      %v569 = vpop.f32.mrb[0].mxu0
      %570 = vdwg.mxu0
      %v571 = vmax.f32 %v510, %v565
      %v572 = vmax.f32 %v511, %v568
      %v573 = vld [vmem:[%s367] sm:$0xf]
      %v574 = vld [vmem:[%s367 + $0x4] sm:$0xf]
      %v575 = vld [vmem:[%s367 + $0x8] sm:$0xf]
      %v576 = vld [vmem:[%s367 + $0xc] sm:$0x3]
      %v581 = vunpack.c.l.b16 %v573
      %v582 = vunpack.c.l.b16 %v574
      %v583 = vunpack.c.l.b16 %v575
      %v584 = vunpack.c.l.b16 %v576
      %v585 = vpack.c.b16 %v582, %v581
      %v586 = vpack.c.b16 %v584, %v583
      %v589 = vand.u32 %v586, %v406
      %591 = vmatprep.subr.bf16.mxu0 0
      %592 = vmatpush1.bf16.msra.mxu0 %v585
      %593 = vmatprep.subr.bf16.mxu0 0
      %594 = vmatpush1.bf16.msra.mxu0 %v589
      %595 = vmatprep.subr.bf16.mxu0 0
      %596 = vmatpush1.bf16.msra.mxu0 0
      %597 = vmatprep.subr.bf16.mxu0 0
      %598 = vmatpush1.bf16.msra.mxu0 0
      %599 = vmatprep.subr.bf16.mxu0 0
      %600 = vmatpush1.bf16.msra.mxu0 0
      %601 = vmatprep.subr.bf16.mxu0 0
      %602 = vmatpush1.bf16.msra.mxu0 0
      %603 = vmatprep.subr.bf16.mxu0 0
      %604 = vmatpush1.bf16.msra.mxu0 0
      %605 = vmatprep.subr.bf16.mxu0 0
      %606 = vmatpush1.bf16.msra.mxu0 0
      %607 = vmatprep.subr.bf16.mxu0 0
      %608 = vmatpush1.bf16.msra.mxu0 0
      %609 = vmatprep.subr.bf16.mxu0 0
      %610 = vmatpush1.bf16.msra.mxu0 0
      %611 = vmatprep.subr.bf16.mxu0 0
      %612 = vmatpush1.bf16.msra.mxu0 0
      %613 = vmatprep.subr.bf16.mxu0 0
      %614 = vmatpush1.bf16.msra.mxu0 0
      %615 = vmatprep.subr.bf16.mxu0 0
      %616 = vmatpush1.bf16.msra.mxu0 0
      %617 = vmatprep.subr.bf16.mxu0 0
      %618 = vmatpush1.bf16.msra.mxu0 0
      %619 = vmatprep.subr.bf16.mxu0 0
      %620 = vmatpush1.bf16.msra.mxu0 0
      %621 = vmatprep.subr.bf16.mxu0 0
      %622 = vmatpush1.bf16.msra.mxu0 0
      %623 = vmatprep.mubr.bf16.mxu0 0
      %624 = vmatmul.mubr.bf16.gmra.mrb[0].mxu0 %v401
      %v625 = vpop.f32.mrb[0].mxu0
      %v626 = vadd.f32 0.0, %v625
      %v627 = vpop.f32.mrb[0].mxu0
      %v628 = vpop.f32.mrb[0].mxu0
      %v629 = vadd.f32 0.0, %v628
      %v630 = vpop.f32.mrb[0].mxu0
      %631 = vdwg.mxu0
      %v632 = vmax.f32 %v571, %v626
      %v633 = vmax.f32 %v572, %v629
      %v634 = vld [vmem:[%s5] sm:$0xff]
      %v635 = vld [vmem:[%s5 + $0x8] sm:$0xff]
      %637 = vset.pattern.permute.xlu0 0
      %638 = vperm.xlu0 %637, %v634
      %v639 = vpop.permute.xlu0 %638
      %642 = vset.pattern.permute.xlu0 0
      %643 = vperm.xlu0 %642, %v635
      %v644 = vpop.permute.xlu0 %643
      %v646 = vadd.f32 %v632, %v639
      %v647 = vadd.f32 %v633, %v644
      %v648 = vmax.f32 %v646, 0.0
      %v649 = vmax.f32 %v647, 0.0
      %v650 = vpack.c.bf16 %v649, %v648
      %v652 = vunpack.c.l.b16 %v650
      %v653 = vunpack.c.h.b16 %v650
      %v654 = vpack.c.b16 %v652, %v652
      %v655 = vpack.c.b16 %v653, %v653
      %658 = vst [vmem:[%s375] sm:$0xf] %v654
      %659 = vst [vmem:[%s375 + $0x4] sm:$0xf] %v655
      %p660 = scmp.lt.s32.totalorder %s21, 1
      %s661 = scalar_select %p660, %s21, 1
      %p662 = scmp.lt.s32.totalorder %s22, 0
      %s663 = scalar_select %p662, %s22, 0
      %s664 = smul.addr %s661, 2
      %s665 = sadd.s32 %s663, %s664
      %s666 = smul.addr %s665, 4
      %s667 = scalar_lea.vmem %s6, %s666
      // Predicated region
      $region45: #{screen_action_net.3} parent=43 // pred_check
        %p668 = pneg %p203
      $region46: #{screen_action_net.3} parent=43 // pred_check_branch
        %670 = sbr.rel (%p668) target = $region48
      $region47: #{screen_action_net.3} parent=43 // pred_region
        _
      $region48: #{screen_action_net.3} parent=43 // pred_fallthru
        _
    $region44: #{screen_action_net.3} parent=5 // pred_fallthru
      _
    %p671 = scmp.le.s32.totalorder 2, %s12
    // Predicated region
    $region49: #{screen_action_net.3} parent=5 // pred_check
      %p672 = pneg %p671
    $region50: #{screen_action_net.3} parent=5 // pred_check_branch
      %674 = sbr.rel (%p672) target = $region52
    $region51: #{screen_action_net.3} parent=5 // pred_region
      %s675 = ssub.s32 %s12, 2
      // Predicated region
      $region53: #{screen_action_net.3} parent=51 // pred_check
        %p676 = pneg %p209
      $region54: #{screen_action_net.3} parent=51 // pred_check_branch
        %678 = sbr.rel (%p676) target = $region56
      $region55: #{screen_action_net.3} parent=51 // pred_region
        %p679 = scmp.lt.s32.totalorder %s23, 1
        %s680 = scalar_select %p679, %s23, 1
        %p681 = scmp.lt.s32.totalorder %s24, 0
        %s682 = scalar_select %p681, %s24, 0
        %s683 = smul.addr %s680, 2
        %s684 = sadd.s32 %s682, %s683
        %s685 = smul.addr %s684, 4
        %s686 = scalar_lea.vmem %s6, %s685
      $region56: #{screen_action_net.3} parent=51 // pred_fallthru
        _
    $region52: #{screen_action_net.3} parent=5 // pred_fallthru
      _
  $region6: #{screen_action_net.3} parent=0 // loop_footer
    %s16 = sadd.s32 1, %s12
  $region7: #{screen_action_net.3} parent=0 // loop_footer_branch
    %11 = sbr.rel target = $region3
  $region8: #{screen_action_net.3} parent=0 // loop_exit
    _

// kernel: screen_action_net.4
$region0: #{screen_action_net.4}
  #allocation0 [shape = 'u32[]', space=smem, size = 0x4, offset = 0x4, fixed_abs, tag = 'smem constant byte address 0x4 - core index']
  #allocation1 [shape = 'u32[144,128]{1,0:T(1,128)}', space=vmem, size = 0x12000, scoped, tag = 'internal scratch']
  %s0 = inlined_call_operand.vmem [shape: bf16[2,144,128], index: 0, kind: input, shape index: {}]
  %s1 = inlined_call_operand.vmem [shape: bf16[2,144,128], index: 1, kind: input, shape index: {}]
  %s2 = inlined_call_operand.vmem [shape: bf16[2,144,128], index: 2, kind: input, shape index: {}]
  %s3 = inlined_call_operand.vmem [shape: bf16[2,144,128], index: 3, kind: input, shape index: {}]
  %s4 = inlined_call_operand.vmem [shape: bf16[32,144], index: 4, kind: input, shape index: {}]
  %s5 = inlined_call_operand.vmem [shape: f32[32,1], index: 5, kind: input, shape index: {}]
  %s6 = inlined_call_operand.vmem [shape: bf16[2,32,128], index: 6, kind: output, shape index: {}]
  %s7 = sld [smem:[#allocation0]]
  $region57: #{screen_action_net.4} parent=0
    _
  %s9 = ssub.s32 1, %s7
  %s10 = scalar_select 0, %s9, %s7
  loop: start=0, step=1, limit=4
  $region2: #{screen_action_net.4} parent=0 // loop_pre_header
    _
  $region3: #{screen_action_net.4} parent=0 // loop_header
    %s12 = sphi 0, %s16
    %p13 = scmp.ge.s32.totalorder %s12, 4
    %s19 = sphi 0, %s31
    %s20 = sphi 0, %s27
    %s21 = sphi 0, %s19
    %s22 = sphi 0, %s20
    %s23 = sphi 0, %s21
    %s24 = sphi 0, %s22
    %s36 = sphi 0, %s38
    %s39 = sphi 0, %s36
    %s40 = sphi 0, %s39
    %s56 = sphi 0, %s40
    %s64 = sphi 0, %s66
    %s67 = sphi 0, %s64
    %s68 = sphi 0, %s67
    %s84 = sphi 0, %s68
    %s92 = sphi 0, %s94
    %s95 = sphi 0, %s92
    %s96 = sphi 0, %s95
    %s112 = sphi 0, %s96
    %s120 = sphi 0, %s122
    %s123 = sphi 0, %s120
    %s124 = sphi 0, %s123
    %s140 = sphi 0, %s124
    %s144 = sphi 0, %s144
    %s146 = sphi 0, %s144
    %s147 = sphi 0, %s146
    %s161 = sphi 0, %s147
    %s165 = sphi 0, %s165
    %s167 = sphi 0, %s165
    %s168 = sphi 0, %s167
    %s182 = sphi 0, %s168
    %s190 = sphi 0, %s192
    %s193 = sphi 0, %s190
    %s194 = sphi 0, %s193
    %s210 = sphi 0, %s194
  $region4: #{screen_action_net.4} parent=0 // loop_header_branch
    %15 = sbr.rel (%p13) target = $region8
  $region5: #{screen_action_net.4} parent=0 // loop_body
    %s17 = ssub.s32 %s12, 1
    %s18 = ssub.s32 %s12, 2
    %s25 = sadd.s32 1, %s20
    %p26 = scmp.ge.s32.totalorder %s25, 1
    %s27 = scalar_select %p26, 0, %s25
    %s28 = sadd.s32 1, %s19
    %s29 = scalar_select %p26, %s28, %s19
    %p30 = scmp.ge.s32.totalorder %s29, 2
    %s31 = scalar_select %p30, 0, %s29
    %s32 = ssub.s32 %s19, %s31
    %s33 = ssub.s32 %s20, %s27
    %s34 = sor.u32 %s32, %s33
    %p35 = scmp.eq.s32.totalorder %s34, 0
    %s37 = sadd.s32 %s36, 1
    %s38 = scalar_select %p35, %s36, %s37
    %p41 = pneg %p35
    %p42 = scmp.eq.s32.totalorder %s12, 1
    %p43 = por %p41, %p42
    %p44 = scmp.ne.s32.totalorder %s36, %s39
    %p45 = scmp.eq.s32.totalorder %s12, 0
    %p46 = por %p44, %p45
    %p47 = scmp.ne.s32.totalorder %s36, %s39
    %p48 = scmp.eq.s32.totalorder %s17, 1
    %p49 = por %p47, %p48
    %p50 = scmp.ne.s32.totalorder %s39, %s40
    %p51 = scmp.eq.s32.totalorder %s17, 0
    %p52 = por %p50, %p51
    %p53 = scmp.ne.s32.totalorder %s39, %s40
    %p54 = scmp.eq.s32.totalorder %s18, 1
    %p55 = por %p53, %p54
    %p57 = scmp.ne.s32.totalorder %s40, %s56
    %p58 = scmp.eq.s32.totalorder %s18, 0
    %p59 = por %p57, %p58
    %s60 = ssub.s32 %s19, %s31
    %s61 = ssub.s32 %s20, %s27
    %s62 = sor.u32 %s60, %s61
    %p63 = scmp.eq.s32.totalorder %s62, 0
    %s65 = sadd.s32 %s64, 1
    %s66 = scalar_select %p63, %s64, %s65
    %p69 = pneg %p63
    %p70 = scmp.eq.s32.totalorder %s12, 1
    %p71 = por %p69, %p70
    %p72 = scmp.ne.s32.totalorder %s64, %s67
    %p73 = scmp.eq.s32.totalorder %s12, 0
    %p74 = por %p72, %p73
    %p75 = scmp.ne.s32.totalorder %s64, %s67
    %p76 = scmp.eq.s32.totalorder %s17, 1
    %p77 = por %p75, %p76
    %p78 = scmp.ne.s32.totalorder %s67, %s68
    %p79 = scmp.eq.s32.totalorder %s17, 0
    %p80 = por %p78, %p79
    %p81 = scmp.ne.s32.totalorder %s67, %s68
    %p82 = scmp.eq.s32.totalorder %s18, 1
    %p83 = por %p81, %p82
    %p85 = scmp.ne.s32.totalorder %s68, %s84
    %p86 = scmp.eq.s32.totalorder %s18, 0
    %p87 = por %p85, %p86
    %s88 = ssub.s32 %s19, %s31
    %s89 = ssub.s32 %s20, %s27
    %s90 = sor.u32 %s88, %s89
    %p91 = scmp.eq.s32.totalorder %s90, 0
    %s93 = sadd.s32 %s92, 1
    %s94 = scalar_select %p91, %s92, %s93
    %p97 = pneg %p91
    %p98 = scmp.eq.s32.totalorder %s12, 1
    %p99 = por %p97, %p98
    %p100 = scmp.ne.s32.totalorder %s92, %s95
    %p101 = scmp.eq.s32.totalorder %s12, 0
    %p102 = por %p100, %p101
    %p103 = scmp.ne.s32.totalorder %s92, %s95
    %p104 = scmp.eq.s32.totalorder %s17, 1
    %p105 = por %p103, %p104
    %p106 = scmp.ne.s32.totalorder %s95, %s96
    %p107 = scmp.eq.s32.totalorder %s17, 0
    %p108 = por %p106, %p107
    %p109 = scmp.ne.s32.totalorder %s95, %s96
    %p110 = scmp.eq.s32.totalorder %s18, 1
    %p111 = por %p109, %p110
    %p113 = scmp.ne.s32.totalorder %s96, %s112
    %p114 = scmp.eq.s32.totalorder %s18, 0
    %p115 = por %p113, %p114
    %s116 = ssub.s32 %s19, %s31
    %s117 = ssub.s32 %s20, %s27
    %s118 = sor.u32 %s116, %s117
    %p119 = scmp.eq.s32.totalorder %s118, 0
    %s121 = sadd.s32 %s120, 1
    %s122 = scalar_select %p119, %s120, %s121
    %p125 = pneg %p119
    %p126 = scmp.eq.s32.totalorder %s12, 1
    %p127 = por %p125, %p126
    %p128 = scmp.ne.s32.totalorder %s120, %s123
    %p129 = scmp.eq.s32.totalorder %s12, 0
    %p130 = por %p128, %p129
    %p131 = scmp.ne.s32.totalorder %s120, %s123
    %p132 = scmp.eq.s32.totalorder %s17, 1
    %p133 = por %p131, %p132
    %p134 = scmp.ne.s32.totalorder %s123, %s124
    %p135 = scmp.eq.s32.totalorder %s17, 0
    %p136 = por %p134, %p135
    %p137 = scmp.ne.s32.totalorder %s123, %s124
    %p138 = scmp.eq.s32.totalorder %s18, 1
    %p139 = por %p137, %p138
    %p141 = scmp.ne.s32.totalorder %s124, %s140
    %p142 = scmp.eq.s32.totalorder %s18, 0
    %p143 = por %p141, %p142
    %s145 = sadd.s32 %s144, 1
    %p148 = scmp.eq.s32.totalorder %s12, 1
    %p149 = scmp.ne.s32.totalorder %s144, %s146
    %p150 = scmp.eq.s32.totalorder %s12, 0
    %p151 = por %p149, %p150
    %p152 = scmp.ne.s32.totalorder %s144, %s146
    %p153 = scmp.eq.s32.totalorder %s17, 1
    %p154 = por %p152, %p153
    %p155 = scmp.ne.s32.totalorder %s146, %s147
    %p156 = scmp.eq.s32.totalorder %s17, 0
    %p157 = por %p155, %p156
    %p158 = scmp.ne.s32.totalorder %s146, %s147
    %p159 = scmp.eq.s32.totalorder %s18, 1
    %p160 = por %p158, %p159
    %p162 = scmp.ne.s32.totalorder %s147, %s161
    %p163 = scmp.eq.s32.totalorder %s18, 0
    %p164 = por %p162, %p163
    %s166 = sadd.s32 %s165, 1
    %p169 = scmp.eq.s32.totalorder %s12, 1
    %p170 = scmp.ne.s32.totalorder %s165, %s167
    %p171 = scmp.eq.s32.totalorder %s12, 0
    %p172 = por %p170, %p171
    %p173 = scmp.ne.s32.totalorder %s165, %s167
    %p174 = scmp.eq.s32.totalorder %s17, 1
    %p175 = por %p173, %p174
    %p176 = scmp.ne.s32.totalorder %s167, %s168
    %p177 = scmp.eq.s32.totalorder %s17, 0
    %p178 = por %p176, %p177
    %p179 = scmp.ne.s32.totalorder %s167, %s168
    %p180 = scmp.eq.s32.totalorder %s18, 1
    %p181 = por %p179, %p180
    %p183 = scmp.ne.s32.totalorder %s168, %s182
    %p184 = scmp.eq.s32.totalorder %s18, 0
    %p185 = por %p183, %p184
    %s186 = ssub.s32 %s19, %s31
    %s187 = ssub.s32 %s20, %s27
    %s188 = sor.u32 %s186, %s187
    %p189 = scmp.eq.s32.totalorder %s188, 0
    %s191 = sadd.s32 %s190, 1
    %s192 = scalar_select %p189, %s190, %s191
    %p195 = pneg %p189
    %p196 = scmp.eq.s32.totalorder %s12, 1
    %p197 = por %p195, %p196
    %p198 = scmp.ne.s32.totalorder %s190, %s193
    %p199 = scmp.eq.s32.totalorder %s12, 0
    %p200 = por %p198, %p199
    %p201 = scmp.ne.s32.totalorder %s190, %s193
    %p202 = scmp.eq.s32.totalorder %s17, 1
    %p203 = por %p201, %p202
    %p204 = scmp.ne.s32.totalorder %s193, %s194
    %p205 = scmp.eq.s32.totalorder %s17, 0
    %p206 = por %p204, %p205
    %p207 = scmp.ne.s32.totalorder %s193, %s194
    %p208 = scmp.eq.s32.totalorder %s18, 1
    %p209 = por %p207, %p208
    %p211 = scmp.ne.s32.totalorder %s194, %s210
    %p212 = scmp.eq.s32.totalorder %s18, 0
    %p213 = por %p211, %p212
    %p214 = scmp.le.s32.totalorder 1, %s12
    %p215 = scmp.lt.s32.totalorder %s12, 3
    %p216 = pnand %p214, %p215
    %p217 = pneg %p216
    // Predicated region
    $region9: #{screen_action_net.4} parent=5 // pred_check
      _
    $region10: #{screen_action_net.4} parent=5 // pred_check_branch
      %219 = sbr.rel (%p216) target = $region12
    $region11: #{screen_action_net.4} parent=5 // pred_region
      %s220 = ssub.s32 %s12, 1
      // Predicated region
      $region13: #{screen_action_net.4} parent=11 // pred_check
        %p221 = pneg %p157
      $region14: #{screen_action_net.4} parent=11 // pred_check_branch
        %223 = sbr.rel (%p221) target = $region16
      $region15: #{screen_action_net.4} parent=11 // pred_region
        _
      $region16: #{screen_action_net.4} parent=11 // pred_fallthru
        _
      // Predicated region
      $region17: #{screen_action_net.4} parent=11 // pred_check
        %p224 = pneg %p178
      $region18: #{screen_action_net.4} parent=11 // pred_check_branch
        %226 = sbr.rel (%p224) target = $region20
      $region19: #{screen_action_net.4} parent=11 // pred_region
        _
      $region20: #{screen_action_net.4} parent=11 // pred_fallthru
        _
    $region12: #{screen_action_net.4} parent=5 // pred_fallthru
      _
    %p227 = scmp.lt.s32.totalorder %s12, 2
    // Predicated region
    $region21: #{screen_action_net.4} parent=5 // pred_check
      %p228 = pneg %p227
    $region22: #{screen_action_net.4} parent=5 // pred_check_branch
      %230 = sbr.rel (%p228) target = $region24
    $region23: #{screen_action_net.4} parent=5 // pred_region
      // Predicated region
      $region25: #{screen_action_net.4} parent=23 // pred_check
        %p231 = pneg %p46
      $region26: #{screen_action_net.4} parent=23 // pred_check_branch
        %233 = sbr.rel (%p231) target = $region28
      $region27: #{screen_action_net.4} parent=23 // pred_region
        %p234 = scmp.lt.s32.totalorder %s19, 1
        %s235 = scalar_select %p234, %s19, 1
        %p236 = scmp.lt.s32.totalorder %s20, 0
        %s237 = scalar_select %p236, %s20, 0
        %s238 = smul.addr %s235, 18
        %s239 = sadd.s32 %s237, %s238
        %s240 = smul.addr %s239, 4
        %s241 = scalar_lea.vmem %s0, %s240
      $region28: #{screen_action_net.4} parent=23 // pred_fallthru
        _
      // Predicated region
      $region29: #{screen_action_net.4} parent=23 // pred_check
        %p242 = pneg %p74
      $region30: #{screen_action_net.4} parent=23 // pred_check_branch
        %244 = sbr.rel (%p242) target = $region32
      $region31: #{screen_action_net.4} parent=23 // pred_region
        %p245 = scmp.lt.s32.totalorder %s19, 1
        %s246 = scalar_select %p245, %s19, 1
        %p247 = scmp.lt.s32.totalorder %s20, 0
        %s248 = scalar_select %p247, %s20, 0
        %s249 = smul.addr %s246, 18
        %s250 = sadd.s32 %s248, %s249
        %s251 = smul.addr %s250, 4
        %s252 = scalar_lea.vmem %s1, %s251
      $region32: #{screen_action_net.4} parent=23 // pred_fallthru
        _
      // Predicated region
      $region33: #{screen_action_net.4} parent=23 // pred_check
        %p253 = pneg %p102
      $region34: #{screen_action_net.4} parent=23 // pred_check_branch
        %255 = sbr.rel (%p253) target = $region36
      $region35: #{screen_action_net.4} parent=23 // pred_region
        %p256 = scmp.lt.s32.totalorder %s19, 1
        %s257 = scalar_select %p256, %s19, 1
        %p258 = scmp.lt.s32.totalorder %s20, 0
        %s259 = scalar_select %p258, %s20, 0
        %s260 = smul.addr %s257, 18
        %s261 = sadd.s32 %s259, %s260
        %s262 = smul.addr %s261, 4
        %s263 = scalar_lea.vmem %s2, %s262
      $region36: #{screen_action_net.4} parent=23 // pred_fallthru
        _
      // Predicated region
      $region37: #{screen_action_net.4} parent=23 // pred_check
        %p264 = pneg %p130
      $region38: #{screen_action_net.4} parent=23 // pred_check_branch
        %266 = sbr.rel (%p264) target = $region40
      $region39: #{screen_action_net.4} parent=23 // pred_region
        %p267 = scmp.lt.s32.totalorder %s19, 1
        %s268 = scalar_select %p267, %s19, 1
        %p269 = scmp.lt.s32.totalorder %s20, 0
        %s270 = scalar_select %p269, %s20, 0
        %s271 = smul.addr %s268, 18
        %s272 = sadd.s32 %s270, %s271
        %s273 = smul.addr %s272, 4
        %s274 = scalar_lea.vmem %s3, %s273
      $region40: #{screen_action_net.4} parent=23 // pred_fallthru
        _
    $region24: #{screen_action_net.4} parent=5 // pred_fallthru
      _
    %p275 = scmp.le.s32.totalorder 1, %s12
    %p276 = scmp.lt.s32.totalorder %s12, 3
    %p277 = pnand %p275, %p276
    %p278 = pneg %p277
    // Predicated region
    $region41: #{screen_action_net.4} parent=5 // pred_check
      _
    $region42: #{screen_action_net.4} parent=5 // pred_check_branch
      %280 = sbr.rel (%p277) target = $region44
    $region43: #{screen_action_net.4} parent=5 // pred_region
      %s281 = ssub.s32 %s12, 1
      %p282 = scmp.lt.s32.totalorder %s21, 1
      %s283 = scalar_select %p282, %s21, 1
      %p284 = scmp.lt.s32.totalorder %s22, 0
      %s285 = scalar_select %p284, %s22, 0
      %s286 = smul.addr %s283, 18
      %s287 = sadd.s32 %s285, %s286
      %s288 = smul.addr %s287, 4
      %s289 = scalar_lea.vmem %s0, %s288
      %p290 = pneg %p52
      %p291 = pneg %p49
      %p292 = scmp.lt.s32.totalorder %s21, 1
      %s293 = scalar_select %p292, %s21, 1
      %p294 = scmp.lt.s32.totalorder %s22, 0
      %s295 = scalar_select %p294, %s22, 0
      %s296 = smul.addr %s293, 18
      %s297 = sadd.s32 %s295, %s296
      %s298 = smul.addr %s297, 4
      %s299 = scalar_lea.vmem %s1, %s298
      %p300 = pneg %p80
      %p301 = pneg %p77
      %p302 = scmp.lt.s32.totalorder %s21, 1
      %s303 = scalar_select %p302, %s21, 1
      %p304 = scmp.lt.s32.totalorder %s22, 0
      %s305 = scalar_select %p304, %s22, 0
      %s306 = smul.addr %s303, 18
      %s307 = sadd.s32 %s305, %s306
      %s308 = smul.addr %s307, 4
      %s309 = scalar_lea.vmem %s2, %s308
      %p310 = pneg %p108
      %p311 = pneg %p105
      %p312 = scmp.lt.s32.totalorder %s21, 1
      %s313 = scalar_select %p312, %s21, 1
      %p314 = scmp.lt.s32.totalorder %s22, 0
      %s315 = scalar_select %p314, %s22, 0
      %s316 = smul.addr %s313, 18
      %s317 = sadd.s32 %s315, %s316
      %s318 = smul.addr %s317, 4
      %s319 = scalar_lea.vmem %s3, %s318
      %p320 = pneg %p136
      %p321 = pneg %p133
      %p322 = pneg %p157
      %p323 = pneg %p154
      %p324 = pneg %p178
      %p325 = pneg %p175
      %p326 = pneg %p206
      %p327 = pneg %p203
      %p328 = scmp.lt.s32.totalorder %s21, 1
      %s329 = scalar_select %p328, %s21, 1
      %p330 = scmp.lt.s32.totalorder %s22, 0
      %s331 = scalar_select %p330, %s22, 0
      %s332 = smul.addr %s329, 4
      %s333 = sadd.s32 %s331, %s332
      %s334 = smul.addr %s333, 4
      %s335 = scalar_lea.vmem %s6, %s334
      %p336 = scmp.lt.s32.totalorder %s21, 1
      %s337 = scalar_select %p336, %s21, 1
      %p338 = scmp.lt.s32.totalorder %s22, 0
      %s339 = scalar_select %p338, %s22, 0
      %s340 = smul.addr %s337, 18
      %s341 = sadd.s32 %s339, %s340
      %s342 = smul.addr %s341, 4
      %s343 = scalar_lea.vmem %s0, %s342
      %p344 = scmp.lt.s32.totalorder %s21, 1
      %s345 = scalar_select %p344, %s21, 1
      %p346 = scmp.lt.s32.totalorder %s22, 0
      %s347 = scalar_select %p346, %s22, 0
      %s348 = smul.addr %s345, 18
      %s349 = sadd.s32 %s347, %s348
      %s350 = smul.addr %s349, 4
      %s351 = scalar_lea.vmem %s1, %s350
      %p352 = scmp.lt.s32.totalorder %s21, 1
      %s353 = scalar_select %p352, %s21, 1
      %p354 = scmp.lt.s32.totalorder %s22, 0
      %s355 = scalar_select %p354, %s22, 0
      %s356 = smul.addr %s353, 18
      %s357 = sadd.s32 %s355, %s356
      %s358 = smul.addr %s357, 4
      %s359 = scalar_lea.vmem %s2, %s358
      %p360 = scmp.lt.s32.totalorder %s21, 1
      %s361 = scalar_select %p360, %s21, 1
      %p362 = scmp.lt.s32.totalorder %s22, 0
      %s363 = scalar_select %p362, %s22, 0
      %s364 = smul.addr %s361, 18
      %s365 = sadd.s32 %s363, %s364
      %s366 = smul.addr %s365, 4
      %s367 = scalar_lea.vmem %s3, %s366
      %p368 = scmp.lt.s32.totalorder %s21, 1
      %s369 = scalar_select %p368, %s21, 1
      %p370 = scmp.lt.s32.totalorder %s22, 0
      %s371 = scalar_select %p370, %s22, 0
      %s372 = smul.addr %s369, 4
      %s373 = sadd.s32 %s371, %s372
      %s374 = smul.addr %s373, 4
      %s375 = scalar_lea.vmem %s6, %s374
      %v377 = vld [vmem:[%s4] sm:$0xff]
      %v378 = vld [vmem:[%s4 + $0x8] sm:$0xff]
      %v379 = vld [vmem:[%s4 + $0x10] sm:$0xff]
      %v380 = vld [vmem:[%s4 + $0x18] sm:$0xff]
      %v381 = vld [vmem:[%s343] sm:$0xf]
      %v382 = vld [vmem:[%s343 + $0x4] sm:$0xf]
      %v383 = vld [vmem:[%s343 + $0x8] sm:$0xf]
      %v384 = vld [vmem:[%s343 + $0xc] sm:$0xf]
      %v385 = vld [vmem:[%s343 + $0x10] sm:$0xf]
      %v386 = vld [vmem:[%s343 + $0x14] sm:$0xf]
      %v387 = vld [vmem:[%s343 + $0x18] sm:$0xf]
      %v388 = vld [vmem:[%s343 + $0x1c] sm:$0xf]
      %v389 = vld [vmem:[%s343 + $0x20] sm:$0xf]
      %v390 = vld [vmem:[%s343 + $0x24] sm:$0xf]
      %v391 = vld [vmem:[%s343 + $0x28] sm:$0xf]
      %v392 = vld [vmem:[%s343 + $0x2c] sm:$0xf]
      %v393 = vld [vmem:[%s343 + $0x30] sm:$0xf]
      %v394 = vld [vmem:[%s343 + $0x34] sm:$0xf]
      %v395 = vld [vmem:[%s343 + $0x38] sm:$0xf]
      %v396 = vld [vmem:[%s343 + $0x3c] sm:$0xf]
      %v397 = vld [vmem:[%s343 + $0x40] sm:$0xf]
      %v398 = vld [vmem:[%s343 + $0x44] sm:$0xf]
      %v403 = vunpack.c.l.b16 %v377
      %v404 = vunpack.c.h.b16 %v377
      %v405 = vunpack.c.l.b16 %v378
      %v406 = vunpack.c.h.b16 %v378
      %v407 = vunpack.c.l.b16 %v379
      %v408 = vunpack.c.h.b16 %v379
      %v409 = vunpack.c.l.b16 %v380
      %v410 = vunpack.c.h.b16 %v380
      %v411 = vpack.c.b16 %v405, %v403
      %v412 = vpack.c.b16 %v406, %v404
      %v413 = vpack.c.b16 %v409, %v407
      %v414 = vpack.c.b16 %v410, %v408
      %v435 = vunpack.c.l.b16 %v381
      %v436 = vunpack.c.l.b16 %v382
      %v437 = vunpack.c.l.b16 %v383
      %v438 = vunpack.c.l.b16 %v384
      %v439 = vunpack.c.l.b16 %v385
      %v440 = vunpack.c.l.b16 %v386
      %v441 = vunpack.c.l.b16 %v387
      %v442 = vunpack.c.l.b16 %v388
      %v443 = vunpack.c.l.b16 %v389
      %v444 = vunpack.c.l.b16 %v390
      %v445 = vunpack.c.l.b16 %v391
      %v446 = vunpack.c.l.b16 %v392
      %v447 = vunpack.c.l.b16 %v393
      %v448 = vunpack.c.l.b16 %v394
      %v449 = vunpack.c.l.b16 %v395
      %v450 = vunpack.c.l.b16 %v396
      %v451 = vunpack.c.l.b16 %v397
      %v452 = vunpack.c.l.b16 %v398
      %v453 = vpack.c.b16 %v436, %v435
      %v454 = vpack.c.b16 %v438, %v437
      %v455 = vpack.c.b16 %v440, %v439
      %v456 = vpack.c.b16 %v442, %v441
      %v457 = vpack.c.b16 %v444, %v443
      %v458 = vpack.c.b16 %v446, %v445
      %v459 = vpack.c.b16 %v448, %v447
      %v460 = vpack.c.b16 %v450, %v449
      %v461 = vpack.c.b16 %v452, %v451
      %vm471 = vcmask 130048
      %v473 = vsel %vm471, %v412, 0
      %v476 = vsel %vm471, %v414, 0
      %478 = vmatprep.subr.bf16.mxu0 0
      %479 = vmatpush1.bf16.msra.mxu0 %v453
      %480 = vmatprep.subr.bf16.mxu0 0
      %481 = vmatpush1.bf16.msra.mxu0 %v454
      %482 = vmatprep.subr.bf16.mxu0 0
      %483 = vmatpush1.bf16.msra.mxu0 %v455
      %484 = vmatprep.subr.bf16.mxu0 0
      %485 = vmatpush1.bf16.msra.mxu0 %v456
      %486 = vmatprep.subr.bf16.mxu0 0
      %487 = vmatpush1.bf16.msra.mxu0 %v457
      %488 = vmatprep.subr.bf16.mxu0 0
      %489 = vmatpush1.bf16.msra.mxu0 %v458
      %490 = vmatprep.subr.bf16.mxu0 0
      %491 = vmatpush1.bf16.msra.mxu0 %v459
      %492 = vmatprep.subr.bf16.mxu0 0
      %493 = vmatpush1.bf16.msra.mxu0 %v460
      %494 = vmatprep.subr.bf16.mxu0 0
      %495 = vmatpush1.bf16.msra.mxu0 %v461
      %496 = vmatprep.subr.bf16.mxu0 0
      %497 = vmatpush1.bf16.msra.mxu0 0
      %498 = vmatprep.subr.bf16.mxu0 0
      %499 = vmatpush1.bf16.msra.mxu0 0
      %500 = vmatprep.subr.bf16.mxu0 0
      %501 = vmatpush1.bf16.msra.mxu0 0
      %502 = vmatprep.subr.bf16.mxu0 0
      %503 = vmatpush1.bf16.msra.mxu0 0
      %504 = vmatprep.subr.bf16.mxu0 0
      %505 = vmatpush1.bf16.msra.mxu0 0
      %506 = vmatprep.subr.bf16.mxu0 0
      %507 = vmatpush1.bf16.msra.mxu0 0
      %508 = vmatprep.subr.bf16.mxu0 0
      %509 = vmatpush1.bf16.msra.mxu0 0
      %510 = vmatprep.mubr.bf16.mxu0 %v473
      %511 = vmatmul.mubr.bf16.gmra.mrb[0].mxu0 %v411
      %v512 = vpop.f32.mrb[0].mxu0
      %v513 = vadd.f32 0.0, %v512
      %v514 = vpop.f32.mrb[0].mxu0
      %v515 = vpop.f32.mrb[0].mxu0
      %v516 = vadd.f32 0.0, %v515
      %v517 = vpop.f32.mrb[0].mxu0
      %518 = vmatprep.mubr.bf16.mxu0 %v476
      %519 = vmatmul.mubr.bf16.gmra.mrb[0].mxu0 %v413
      %v520 = vpop.f32.mrb[0].mxu0
      %v521 = vadd.f32 0.0, %v520
      %v522 = vpop.f32.mrb[0].mxu0
      %v523 = vpop.f32.mrb[0].mxu0
      %v524 = vadd.f32 0.0, %v523
      %v525 = vpop.f32.mrb[0].mxu0
      %526 = vdwg.mxu0
      %v527 = vld [vmem:[%s351] sm:$0xf]
      %v528 = vld [vmem:[%s351 + $0x4] sm:$0xf]
      %v529 = vld [vmem:[%s351 + $0x8] sm:$0xf]
      %v530 = vld [vmem:[%s351 + $0xc] sm:$0xf]
      %v531 = vld [vmem:[%s351 + $0x10] sm:$0xf]
      %v532 = vld [vmem:[%s351 + $0x14] sm:$0xf]
      %v533 = vld [vmem:[%s351 + $0x18] sm:$0xf]
      %v534 = vld [vmem:[%s351 + $0x1c] sm:$0xf]
      %v535 = vld [vmem:[%s351 + $0x20] sm:$0xf]
      %v536 = vld [vmem:[%s351 + $0x24] sm:$0xf]
      %v537 = vld [vmem:[%s351 + $0x28] sm:$0xf]
      %v538 = vld [vmem:[%s351 + $0x2c] sm:$0xf]
      %v539 = vld [vmem:[%s351 + $0x30] sm:$0xf]
      %v540 = vld [vmem:[%s351 + $0x34] sm:$0xf]
      %v541 = vld [vmem:[%s351 + $0x38] sm:$0xf]
      %v542 = vld [vmem:[%s351 + $0x3c] sm:$0xf]
      %v543 = vld [vmem:[%s351 + $0x40] sm:$0xf]
      %v544 = vld [vmem:[%s351 + $0x44] sm:$0xf]
      %v563 = vunpack.c.l.b16 %v527
      %v564 = vunpack.c.l.b16 %v528
      %v565 = vunpack.c.l.b16 %v529
      %v566 = vunpack.c.l.b16 %v530
      %v567 = vunpack.c.l.b16 %v531
      %v568 = vunpack.c.l.b16 %v532
      %v569 = vunpack.c.l.b16 %v533
      %v570 = vunpack.c.l.b16 %v534
      %v571 = vunpack.c.l.b16 %v535
      %v572 = vunpack.c.l.b16 %v536
      %v573 = vunpack.c.l.b16 %v537
      %v574 = vunpack.c.l.b16 %v538
      %v575 = vunpack.c.l.b16 %v539
      %v576 = vunpack.c.l.b16 %v540
      %v577 = vunpack.c.l.b16 %v541
      %v578 = vunpack.c.l.b16 %v542
      %v579 = vunpack.c.l.b16 %v543
      %v580 = vunpack.c.l.b16 %v544
      %v581 = vpack.c.b16 %v564, %v563
      %v582 = vpack.c.b16 %v566, %v565
      %v583 = vpack.c.b16 %v568, %v567
      %v584 = vpack.c.b16 %v570, %v569
      %v585 = vpack.c.b16 %v572, %v571
      %v586 = vpack.c.b16 %v574, %v573
      %v587 = vpack.c.b16 %v576, %v575
      %v588 = vpack.c.b16 %v578, %v577
      %v589 = vpack.c.b16 %v580, %v579
      %599 = vmatprep.subr.bf16.mxu0 0
      %600 = vmatpush1.bf16.msra.mxu0 %v581
      %601 = vmatprep.subr.bf16.mxu0 0
      %602 = vmatpush1.bf16.msra.mxu0 %v582
      %603 = vmatprep.subr.bf16.mxu0 0
      %604 = vmatpush1.bf16.msra.mxu0 %v583
      %605 = vmatprep.subr.bf16.mxu0 0
      %606 = vmatpush1.bf16.msra.mxu0 %v584
      %607 = vmatprep.subr.bf16.mxu0 0
      %608 = vmatpush1.bf16.msra.mxu0 %v585
      %609 = vmatprep.subr.bf16.mxu0 0
      %610 = vmatpush1.bf16.msra.mxu0 %v586
      %611 = vmatprep.subr.bf16.mxu0 0
      %612 = vmatpush1.bf16.msra.mxu0 %v587
      %613 = vmatprep.subr.bf16.mxu0 0
      %614 = vmatpush1.bf16.msra.mxu0 %v588
      %615 = vmatprep.subr.bf16.mxu0 0
      %616 = vmatpush1.bf16.msra.mxu0 %v589
      %617 = vmatprep.subr.bf16.mxu0 0
      %618 = vmatpush1.bf16.msra.mxu0 0
      %619 = vmatprep.subr.bf16.mxu0 0
      %620 = vmatpush1.bf16.msra.mxu0 0
      %621 = vmatprep.subr.bf16.mxu0 0
      %622 = vmatpush1.bf16.msra.mxu0 0
      %623 = vmatprep.subr.bf16.mxu0 0
      %624 = vmatpush1.bf16.msra.mxu0 0
      %625 = vmatprep.subr.bf16.mxu0 0
      %626 = vmatpush1.bf16.msra.mxu0 0
      %627 = vmatprep.subr.bf16.mxu0 0
      %628 = vmatpush1.bf16.msra.mxu0 0
      %629 = vmatprep.subr.bf16.mxu0 0
      %630 = vmatpush1.bf16.msra.mxu0 0
      %631 = vmatprep.mubr.bf16.mxu0 %v473
      %632 = vmatmul.mubr.bf16.gmra.mrb[0].mxu0 %v411
      %v633 = vpop.f32.mrb[0].mxu0
      %v634 = vadd.f32 0.0, %v633
      %v635 = vpop.f32.mrb[0].mxu0
      %v636 = vpop.f32.mrb[0].mxu0
      %v637 = vadd.f32 0.0, %v636
      %v638 = vpop.f32.mrb[0].mxu0
      %639 = vmatprep.mubr.bf16.mxu0 %v476
      %640 = vmatmul.mubr.bf16.gmra.mrb[0].mxu0 %v413
      %v641 = vpop.f32.mrb[0].mxu0
      %v642 = vadd.f32 0.0, %v641
      %v643 = vpop.f32.mrb[0].mxu0
      %v644 = vpop.f32.mrb[0].mxu0
      %v645 = vadd.f32 0.0, %v644
      %v646 = vpop.f32.mrb[0].mxu0
      %647 = vdwg.mxu0
      %v648 = vmax.f32 %v513, %v634
      %v649 = vmax.f32 %v516, %v637
      %v650 = vmax.f32 %v521, %v642
      %v651 = vmax.f32 %v524, %v645
      %v652 = vld [vmem:[%s359] sm:$0xf]
      %v653 = vld [vmem:[%s359 + $0x4] sm:$0xf]
      %v654 = vld [vmem:[%s359 + $0x8] sm:$0xf]
      %v655 = vld [vmem:[%s359 + $0xc] sm:$0xf]
      %v656 = vld [vmem:[%s359 + $0x10] sm:$0xf]
      %v657 = vld [vmem:[%s359 + $0x14] sm:$0xf]
      %v658 = vld [vmem:[%s359 + $0x18] sm:$0xf]
      %v659 = vld [vmem:[%s359 + $0x1c] sm:$0xf]
      %v660 = vld [vmem:[%s359 + $0x20] sm:$0xf]
      %v661 = vld [vmem:[%s359 + $0x24] sm:$0xf]
      %v662 = vld [vmem:[%s359 + $0x28] sm:$0xf]
      %v663 = vld [vmem:[%s359 + $0x2c] sm:$0xf]
      %v664 = vld [vmem:[%s359 + $0x30] sm:$0xf]
      %v665 = vld [vmem:[%s359 + $0x34] sm:$0xf]
      %v666 = vld [vmem:[%s359 + $0x38] sm:$0xf]
      %v667 = vld [vmem:[%s359 + $0x3c] sm:$0xf]
      %v668 = vld [vmem:[%s359 + $0x40] sm:$0xf]
      %v669 = vld [vmem:[%s359 + $0x44] sm:$0xf]
      %v688 = vunpack.c.l.b16 %v652
      %v689 = vunpack.c.l.b16 %v653
      %v690 = vunpack.c.l.b16 %v654
      %v691 = vunpack.c.l.b16 %v655
      %v692 = vunpack.c.l.b16 %v656
      %v693 = vunpack.c.l.b16 %v657
      %v694 = vunpack.c.l.b16 %v658
      %v695 = vunpack.c.l.b16 %v659
      %v696 = vunpack.c.l.b16 %v660
      %v697 = vunpack.c.l.b16 %v661
      %v698 = vunpack.c.l.b16 %v662
      %v699 = vunpack.c.l.b16 %v663
      %v700 = vunpack.c.l.b16 %v664
      %v701 = vunpack.c.l.b16 %v665
      %v702 = vunpack.c.l.b16 %v666
      %v703 = vunpack.c.l.b16 %v667
      %v704 = vunpack.c.l.b16 %v668
      %v705 = vunpack.c.l.b16 %v669
      %v706 = vpack.c.b16 %v689, %v688
      %v707 = vpack.c.b16 %v691, %v690
      %v708 = vpack.c.b16 %v693, %v692
      %v709 = vpack.c.b16 %v695, %v694
      %v710 = vpack.c.b16 %v697, %v696
      %v711 = vpack.c.b16 %v699, %v698
      %v712 = vpack.c.b16 %v701, %v700
      %v713 = vpack.c.b16 %v703, %v702
      %v714 = vpack.c.b16 %v705, %v704
      %724 = vmatprep.subr.bf16.mxu0 0
      %725 = vmatpush1.bf16.msra.mxu0 %v706
      %726 = vmatprep.subr.bf16.mxu0 0
      %727 = vmatpush1.bf16.msra.mxu0 %v707
      %728 = vmatprep.subr.bf16.mxu0 0
      %729 = vmatpush1.bf16.msra.mxu0 %v708
      %730 = vmatprep.subr.bf16.mxu0 0
      %731 = vmatpush1.bf16.msra.mxu0 %v709
      %732 = vmatprep.subr.bf16.mxu0 0
      %733 = vmatpush1.bf16.msra.mxu0 %v710
      %734 = vmatprep.subr.bf16.mxu0 0
      %735 = vmatpush1.bf16.msra.mxu0 %v711
      %736 = vmatprep.subr.bf16.mxu0 0
      %737 = vmatpush1.bf16.msra.mxu0 %v712
      %738 = vmatprep.subr.bf16.mxu0 0
      %739 = vmatpush1.bf16.msra.mxu0 %v713
      %740 = vmatprep.subr.bf16.mxu0 0
      %741 = vmatpush1.bf16.msra.mxu0 %v714
      %742 = vmatprep.subr.bf16.mxu0 0
      %743 = vmatpush1.bf16.msra.mxu0 0
      %744 = vmatprep.subr.bf16.mxu0 0
      %745 = vmatpush1.bf16.msra.mxu0 0
      %746 = vmatprep.subr.bf16.mxu0 0
      %747 = vmatpush1.bf16.msra.mxu0 0
      %748 = vmatprep.subr.bf16.mxu0 0
      %749 = vmatpush1.bf16.msra.mxu0 0
      %750 = vmatprep.subr.bf16.mxu0 0
      %751 = vmatpush1.bf16.msra.mxu0 0
      %752 = vmatprep.subr.bf16.mxu0 0
      %753 = vmatpush1.bf16.msra.mxu0 0
      %754 = vmatprep.subr.bf16.mxu0 0
      %755 = vmatpush1.bf16.msra.mxu0 0
      %756 = vmatprep.mubr.bf16.mxu0 %v473
      %757 = vmatmul.mubr.bf16.gmra.mrb[0].mxu0 %v411
      %v758 = vpop.f32.mrb[0].mxu0
      %v759 = vadd.f32 0.0, %v758
      %v760 = vpop.f32.mrb[0].mxu0
      %v761 = vpop.f32.mrb[0].mxu0
      %v762 = vadd.f32 0.0, %v761
      %v763 = vpop.f32.mrb[0].mxu0
      %764 = vmatprep.mubr.bf16.mxu0 %v476
      %765 = vmatmul.mubr.bf16.gmra.mrb[0].mxu0 %v413
      %v766 = vpop.f32.mrb[0].mxu0
      %v767 = vadd.f32 0.0, %v766
      %v768 = vpop.f32.mrb[0].mxu0
      %v769 = vpop.f32.mrb[0].mxu0
      %v770 = vadd.f32 0.0, %v769
      %v771 = vpop.f32.mrb[0].mxu0
      %772 = vdwg.mxu0
      %v773 = vmax.f32 %v648, %v759
      %v774 = vmax.f32 %v649, %v762
      %v775 = vmax.f32 %v650, %v767
      %v776 = vmax.f32 %v651, %v770
      %v777 = vld [vmem:[%s367] sm:$0xf]
      %v778 = vld [vmem:[%s367 + $0x4] sm:$0xf]
      %v779 = vld [vmem:[%s367 + $0x8] sm:$0xf]
      %v780 = vld [vmem:[%s367 + $0xc] sm:$0xf]
      %v781 = vld [vmem:[%s367 + $0x10] sm:$0xf]
      %v782 = vld [vmem:[%s367 + $0x14] sm:$0xf]
      %v783 = vld [vmem:[%s367 + $0x18] sm:$0xf]
      %v784 = vld [vmem:[%s367 + $0x1c] sm:$0xf]
      %v785 = vld [vmem:[%s367 + $0x20] sm:$0xf]
      %v786 = vld [vmem:[%s367 + $0x24] sm:$0xf]
      %v787 = vld [vmem:[%s367 + $0x28] sm:$0xf]
      %v788 = vld [vmem:[%s367 + $0x2c] sm:$0xf]
      %v789 = vld [vmem:[%s367 + $0x30] sm:$0xf]
      %v790 = vld [vmem:[%s367 + $0x34] sm:$0xf]
      %v791 = vld [vmem:[%s367 + $0x38] sm:$0xf]
      %v792 = vld [vmem:[%s367 + $0x3c] sm:$0xf]
      %v793 = vld [vmem:[%s367 + $0x40] sm:$0xf]
      %v794 = vld [vmem:[%s367 + $0x44] sm:$0xf]
      %v813 = vunpack.c.l.b16 %v777
      %v814 = vunpack.c.l.b16 %v778
      %v815 = vunpack.c.l.b16 %v779
      %v816 = vunpack.c.l.b16 %v780
      %v817 = vunpack.c.l.b16 %v781
      %v818 = vunpack.c.l.b16 %v782
      %v819 = vunpack.c.l.b16 %v783
      %v820 = vunpack.c.l.b16 %v784
      %v821 = vunpack.c.l.b16 %v785
      %v822 = vunpack.c.l.b16 %v786
      %v823 = vunpack.c.l.b16 %v787
      %v824 = vunpack.c.l.b16 %v788
      %v825 = vunpack.c.l.b16 %v789
      %v826 = vunpack.c.l.b16 %v790
      %v827 = vunpack.c.l.b16 %v791
      %v828 = vunpack.c.l.b16 %v792
      %v829 = vunpack.c.l.b16 %v793
      %v830 = vunpack.c.l.b16 %v794
      %v831 = vpack.c.b16 %v814, %v813
      %v832 = vpack.c.b16 %v816, %v815
      %v833 = vpack.c.b16 %v818, %v817
      %v834 = vpack.c.b16 %v820, %v819
      %v835 = vpack.c.b16 %v822, %v821
      %v836 = vpack.c.b16 %v824, %v823
      %v837 = vpack.c.b16 %v826, %v825
      %v838 = vpack.c.b16 %v828, %v827
      %v839 = vpack.c.b16 %v830, %v829
      %849 = vmatprep.subr.bf16.mxu0 0
      %850 = vmatpush1.bf16.msra.mxu0 %v831
      %851 = vmatprep.subr.bf16.mxu0 0
      %852 = vmatpush1.bf16.msra.mxu0 %v832
      %853 = vmatprep.subr.bf16.mxu0 0
      %854 = vmatpush1.bf16.msra.mxu0 %v833
      %855 = vmatprep.subr.bf16.mxu0 0
      %856 = vmatpush1.bf16.msra.mxu0 %v834
      %857 = vmatprep.subr.bf16.mxu0 0
      %858 = vmatpush1.bf16.msra.mxu0 %v835
      %859 = vmatprep.subr.bf16.mxu0 0
      %860 = vmatpush1.bf16.msra.mxu0 %v836
      %861 = vmatprep.subr.bf16.mxu0 0
      %862 = vmatpush1.bf16.msra.mxu0 %v837
      %863 = vmatprep.subr.bf16.mxu0 0
      %864 = vmatpush1.bf16.msra.mxu0 %v838
      %865 = vmatprep.subr.bf16.mxu0 0
      %866 = vmatpush1.bf16.msra.mxu0 %v839
      %867 = vmatprep.subr.bf16.mxu0 0
      %868 = vmatpush1.bf16.msra.mxu0 0
      %869 = vmatprep.subr.bf16.mxu0 0
      %870 = vmatpush1.bf16.msra.mxu0 0
      %871 = vmatprep.subr.bf16.mxu0 0
      %872 = vmatpush1.bf16.msra.mxu0 0
      %873 = vmatprep.subr.bf16.mxu0 0
      %874 = vmatpush1.bf16.msra.mxu0 0
      %875 = vmatprep.subr.bf16.mxu0 0
      %876 = vmatpush1.bf16.msra.mxu0 0
      %877 = vmatprep.subr.bf16.mxu0 0
      %878 = vmatpush1.bf16.msra.mxu0 0
      %879 = vmatprep.subr.bf16.mxu0 0
      %880 = vmatpush1.bf16.msra.mxu0 0
      %881 = vmatprep.mubr.bf16.mxu0 %v473
      %882 = vmatmul.mubr.bf16.gmra.mrb[0].mxu0 %v411
      %v883 = vpop.f32.mrb[0].mxu0
      %v884 = vadd.f32 0.0, %v883
      %v885 = vpop.f32.mrb[0].mxu0
      %v886 = vpop.f32.mrb[0].mxu0
      %v887 = vadd.f32 0.0, %v886
      %v888 = vpop.f32.mrb[0].mxu0
      %889 = vmatprep.mubr.bf16.mxu0 %v476
      %890 = vmatmul.mubr.bf16.gmra.mrb[0].mxu0 %v413
      %v891 = vpop.f32.mrb[0].mxu0
      %v892 = vadd.f32 0.0, %v891
      %v893 = vpop.f32.mrb[0].mxu0
      %v894 = vpop.f32.mrb[0].mxu0
      %v895 = vadd.f32 0.0, %v894
      %v896 = vpop.f32.mrb[0].mxu0
      %897 = vdwg.mxu0
      %v898 = vmax.f32 %v773, %v884
      %v899 = vmax.f32 %v774, %v887
      %v900 = vmax.f32 %v775, %v892
      %v901 = vmax.f32 %v776, %v895
      %v902 = vld [vmem:[%s5] sm:$0xff]
      %v903 = vld [vmem:[%s5 + $0x8] sm:$0xff]
      %v904 = vld [vmem:[%s5 + $0x10] sm:$0xff]
      %v905 = vld [vmem:[%s5 + $0x18] sm:$0xff]
      %907 = vset.pattern.permute.xlu0 0
      %908 = vperm.xlu0 %907, %v902
      %v909 = vpop.permute.xlu0 %908
      %912 = vset.pattern.permute.xlu0 0
      %913 = vperm.xlu0 %912, %v903
      %v914 = vpop.permute.xlu0 %913
      %917 = vset.pattern.permute.xlu0 0
      %918 = vperm.xlu0 %917, %v904
      %v919 = vpop.permute.xlu0 %918
      %922 = vset.pattern.permute.xlu0 0
      %923 = vperm.xlu0 %922, %v905
      %v924 = vpop.permute.xlu0 %923
      %v926 = vadd.f32 %v898, %v909
      %v927 = vadd.f32 %v899, %v914
      %v928 = vadd.f32 %v900, %v919
      %v929 = vadd.f32 %v901, %v924
      %v930 = vmax.f32 %v926, 0.0
      %v931 = vmax.f32 %v927, 0.0
      %v932 = vmax.f32 %v928, 0.0
      %v933 = vmax.f32 %v929, 0.0
      %v934 = vpack.c.bf16 %v931, %v930
      %v935 = vpack.c.bf16 %v933, %v932
      %v938 = vunpack.c.l.b16 %v934
      %v939 = vunpack.c.h.b16 %v934
      %v940 = vunpack.c.l.b16 %v935
      %v941 = vunpack.c.h.b16 %v935
      %v942 = vpack.c.b16 %v938, %v938
      %v943 = vpack.c.b16 %v939, %v939
      %v944 = vpack.c.b16 %v940, %v940
      %v945 = vpack.c.b16 %v941, %v941
      %950 = vst [vmem:[%s375] sm:$0xf] %v942
      %951 = vst [vmem:[%s375 + $0x4] sm:$0xf] %v943
      %952 = vst [vmem:[%s375 + $0x8] sm:$0xf] %v944
      %953 = vst [vmem:[%s375 + $0xc] sm:$0xf] %v945
      %p954 = scmp.lt.s32.totalorder %s21, 1
      %s955 = scalar_select %p954, %s21, 1
      %p956 = scmp.lt.s32.totalorder %s22, 0
      %s957 = scalar_select %p956, %s22, 0
      %s958 = smul.addr %s955, 4
      %s959 = sadd.s32 %s957, %s958
      %s960 = smul.addr %s959, 4
      %s961 = scalar_lea.vmem %s6, %s960
      // Predicated region
      $region45: #{screen_action_net.4} parent=43 // pred_check
        %p962 = pneg %p203
      $region46: #{screen_action_net.4} parent=43 // pred_check_branch
        %964 = sbr.rel (%p962) target = $region48
      $region47: #{screen_action_net.4} parent=43 // pred_region
        _
      $region48: #{screen_action_net.4} parent=43 // pred_fallthru
        _
    $region44: #{screen_action_net.4} parent=5 // pred_fallthru
      _
    %p965 = scmp.le.s32.totalorder 2, %s12
    // Predicated region
    $region49: #{screen_action_net.4} parent=5 // pred_check
      %p966 = pneg %p965
    $region50: #{screen_action_net.4} parent=5 // pred_check_branch
      %968 = sbr.rel (%p966) target = $region52
    $region51: #{screen_action_net.4} parent=5 // pred_region
      %s969 = ssub.s32 %s12, 2
      // Predicated region
      $region53: #{screen_action_net.4} parent=51 // pred_check
        %p970 = pneg %p209
      $region54: #{screen_action_net.4} parent=51 // pred_check_branch
        %972 = sbr.rel (%p970) target = $region56
      $region55: #{screen_action_net.4} parent=51 // pred_region
        %p973 = scmp.lt.s32.totalorder %s23, 1
        %s974 = scalar_select %p973, %s23, 1
        %p975 = scmp.lt.s32.totalorder %s24, 0
        %s976 = scalar_select %p975, %s24, 0
        %s977 = smul.addr %s974, 4
        %s978 = sadd.s32 %s976, %s977
        %s979 = smul.addr %s978, 4
        %s980 = scalar_lea.vmem %s6, %s979
      $region56: #{screen_action_net.4} parent=51 // pred_fallthru
        _
    $region52: #{screen_action_net.4} parent=5 // pred_fallthru
      _
  $region6: #{screen_action_net.4} parent=0 // loop_footer
    %s16 = sadd.s32 1, %s12
  $region7: #{screen_action_net.4} parent=0 // loop_footer_branch
    %11 = sbr.rel target = $region3
  $region8: #{screen_action_net.4} parent=0 // loop_exit
    _

// kernel: screen_action_net.5
$region0: #{screen_action_net.5}
  #allocation0 [shape = 'u32[]', space=smem, size = 0x4, offset = 0x4, fixed_abs, tag = 'smem constant byte address 0x4 - core index']
  #allocation1 [shape = 'u32[144,128]{1,0:T(1,128)}', space=vmem, size = 0x12000, scoped, tag = 'internal scratch']
  #allocation2 [shape = 'f32[2,128]{1,0:T(2,128)}', space=vmem, size = 0x400, scoped, tag = 'scratch operand']
  %s0 = inlined_call_operand.vmem [shape: bf16[2,512], index: 0, kind: input, shape index: {}]
  %s1 = inlined_call_operand.vmem [shape: bf16[512,128], index: 1, kind: input, shape index: {}]
  %s2 = inlined_call_operand.vmem [shape: f32[1,128], index: 2, kind: input, shape index: {}]
  %s3 = inlined_call_operand.vmem [shape: bf16[128,4], index: 3, kind: input, shape index: {}]
  %s4 = inlined_call_operand.vmem [shape: f32[1,4], index: 4, kind: input, shape index: {}]
  %s5 = inlined_call_operand.hbm [shape: f32[2,4], index: 5, kind: output, shape index: {}]
  %s6 = sld [smem:[#allocation0]]
  $region38: #{screen_action_net.5} parent=0
    _
  %s8 = ssub.s32 1, %s6
  %s9 = scalar_select 0, %s8, %s6
  $region1: #{screen_action_net.5} parent=0
    #allocation3 [shape = 'u8[1024]{0}', space=vmem, size = 0x400, scoped, tag = 'output window, operand 0, single buffered']
    #allocation4 [shape = 's32[1]{0}', space=sflag, size = 0x4, scoped, tag = 'scoped memory for screen_action_net.5']
    %10 = vsyncpa [#allocation4], 0
    // Predicated region
    $region2: #{screen_action_net.5} parent=1 // pred_check
      _
    $region3: #{screen_action_net.5} parent=1 // pred_check_branch
      %12 = sbr.rel (0) target = $region5
    $region4: #{screen_action_net.5} parent=1 // pred_region
      _
    $region5: #{screen_action_net.5} parent=1 // pred_fallthru
      _
    // Predicated region
    $region6: #{screen_action_net.5} parent=1 // pred_check
      _
    $region7: #{screen_action_net.5} parent=1 // pred_check_branch
      %14 = sbr.rel (0) target = $region9
    $region8: #{screen_action_net.5} parent=1 // pred_region
      _
    $region9: #{screen_action_net.5} parent=1 // pred_fallthru
      _
    // Predicated region
    $region10: #{screen_action_net.5} parent=1 // pred_check
      _
    $region11: #{screen_action_net.5} parent=1 // pred_check_branch
      %16 = sbr.rel (0) target = $region13
    $region12: #{screen_action_net.5} parent=1 // pred_region
      _
    $region13: #{screen_action_net.5} parent=1 // pred_fallthru
      _
    // Predicated region
    $region14: #{screen_action_net.5} parent=1 // pred_check
      _
    $region15: #{screen_action_net.5} parent=1 // pred_check_branch
      %18 = sbr.rel (0) target = $region17
    $region16: #{screen_action_net.5} parent=1 // pred_region
      _
    $region17: #{screen_action_net.5} parent=1 // pred_fallthru
      _
    // Predicated region
    $region18: #{screen_action_net.5} parent=1 // pred_check
      _
    $region19: #{screen_action_net.5} parent=1 // pred_check_branch
      %20 = sbr.rel (0) target = $region21
    $region20: #{screen_action_net.5} parent=1 // pred_region
      _
    $region21: #{screen_action_net.5} parent=1 // pred_fallthru
      _
    %p22 = scmp.eq.s32.totalorder 0, 0
    // Predicated region
    $region22: #{screen_action_net.5} parent=1 // pred_check
      %p23 = pneg %p22
    $region23: #{screen_action_net.5} parent=1 // pred_check_branch
      %25 = sbr.rel (%p23) target = $region25
    $region24: #{screen_action_net.5} parent=1 // pred_region
      %26 = vst [vmem:[#allocation2] sm:$0x3] 0.0
    $region25: #{screen_action_net.5} parent=1 // pred_fallthru
      _
    %v27 = vld [vmem:[#allocation2] sm:$0x3]
    %v28 = vld [vmem:[%s0] sm:$0xf]
    %v29 = vld [vmem:[%s1] sm:$0xf]
    %v30 = vld [vmem:[%s1 + $0x4] sm:$0xf]
    %v31 = vld [vmem:[%s1 + $0x8] sm:$0xf]
    %v32 = vld [vmem:[%s1 + $0xc] sm:$0xf]
    %v33 = vld [vmem:[%s1 + $0x10] sm:$0xf]
    %v34 = vld [vmem:[%s1 + $0x14] sm:$0xf]
    %v35 = vld [vmem:[%s1 + $0x18] sm:$0xf]
    %v36 = vld [vmem:[%s1 + $0x1c] sm:$0xf]
    %v37 = vld [vmem:[%s1 + $0x20] sm:$0xf]
    %v38 = vld [vmem:[%s1 + $0x24] sm:$0xf]
    %v39 = vld [vmem:[%s1 + $0x28] sm:$0xf]
    %v40 = vld [vmem:[%s1 + $0x2c] sm:$0xf]
    %v41 = vld [vmem:[%s1 + $0x30] sm:$0xf]
    %v42 = vld [vmem:[%s1 + $0x34] sm:$0xf]
    %v43 = vld [vmem:[%s1 + $0x38] sm:$0xf]
    %v44 = vld [vmem:[%s1 + $0x3c] sm:$0xf]
    %v45 = vld [vmem:[%s1 + $0x40] sm:$0xf]
    %v46 = vld [vmem:[%s1 + $0x44] sm:$0xf]
    %v47 = vld [vmem:[%s1 + $0x48] sm:$0xf]
    %v48 = vld [vmem:[%s1 + $0x4c] sm:$0xf]
    %v49 = vld [vmem:[%s1 + $0x50] sm:$0xf]
    %v50 = vld [vmem:[%s1 + $0x54] sm:$0xf]
    %v51 = vld [vmem:[%s1 + $0x58] sm:$0xf]
    %v52 = vld [vmem:[%s1 + $0x5c] sm:$0xf]
    %v53 = vld [vmem:[%s1 + $0x60] sm:$0xf]
    %v54 = vld [vmem:[%s1 + $0x64] sm:$0xf]
    %v55 = vld [vmem:[%s1 + $0x68] sm:$0xf]
    %v56 = vld [vmem:[%s1 + $0x6c] sm:$0xf]
    %v57 = vld [vmem:[%s1 + $0x70] sm:$0xf]
    %v58 = vld [vmem:[%s1 + $0x74] sm:$0xf]
    %v59 = vld [vmem:[%s1 + $0x78] sm:$0xf]
    %v60 = vld [vmem:[%s1 + $0x7c] sm:$0xf]
    %v61 = vld [vmem:[%s1 + $0x80] sm:$0xf]
    %v62 = vld [vmem:[%s1 + $0x84] sm:$0xf]
    %v63 = vld [vmem:[%s1 + $0x88] sm:$0xf]
    %v64 = vld [vmem:[%s1 + $0x8c] sm:$0xf]
    %v65 = vld [vmem:[%s1 + $0x90] sm:$0xf]
    %v66 = vld [vmem:[%s1 + $0x94] sm:$0xf]
    %v67 = vld [vmem:[%s1 + $0x98] sm:$0xf]
    %v68 = vld [vmem:[%s1 + $0x9c] sm:$0xf]
    %v69 = vld [vmem:[%s1 + $0xa0] sm:$0xf]
    %v70 = vld [vmem:[%s1 + $0xa4] sm:$0xf]
    %v71 = vld [vmem:[%s1 + $0xa8] sm:$0xf]
    %v72 = vld [vmem:[%s1 + $0xac] sm:$0xf]
    %v73 = vld [vmem:[%s1 + $0xb0] sm:$0xf]
    %v74 = vld [vmem:[%s1 + $0xb4] sm:$0xf]
    %v75 = vld [vmem:[%s1 + $0xb8] sm:$0xf]
    %v76 = vld [vmem:[%s1 + $0xbc] sm:$0xf]
    %v77 = vld [vmem:[%s1 + $0xc0] sm:$0xf]
    %v78 = vld [vmem:[%s1 + $0xc4] sm:$0xf]
    %v79 = vld [vmem:[%s1 + $0xc8] sm:$0xf]
    %v80 = vld [vmem:[%s1 + $0xcc] sm:$0xf]
    %v81 = vld [vmem:[%s1 + $0xd0] sm:$0xf]
    %v82 = vld [vmem:[%s1 + $0xd4] sm:$0xf]
    %v83 = vld [vmem:[%s1 + $0xd8] sm:$0xf]
    %v84 = vld [vmem:[%s1 + $0xdc] sm:$0xf]
    %v85 = vld [vmem:[%s1 + $0xe0] sm:$0xf]
    %v86 = vld [vmem:[%s1 + $0xe4] sm:$0xf]
    %v87 = vld [vmem:[%s1 + $0xe8] sm:$0xf]
    %v88 = vld [vmem:[%s1 + $0xec] sm:$0xf]
    %v89 = vld [vmem:[%s1 + $0xf0] sm:$0xf]
    %v90 = vld [vmem:[%s1 + $0xf4] sm:$0xf]
    %v91 = vld [vmem:[%s1 + $0xf8] sm:$0xf]
    %v92 = vld [vmem:[%s1 + $0xfc] sm:$0xf]
    %v95 = vunpack.c.l.s4 1966171168
    %v96 = vunpack.c.0.s8 %v95
    %v97 = vlaneseq
    %v98 = vshrl.u32 %v97, 7
    %v99 = vsub.s32 %v96, %v98
    %v100 = vrot.slane %v28, %v99
    %v101 = vcombine.high %v100, %v100
    %v103 = vunpack.c.l.s4 1966171168
    %v104 = vunpack.c.0.s8 %v103
    %v105 = vlaneseq
    %v106 = vshrl.u32 %v105, 7
    %v107 = vsub.s32 %v104, %v106
    %v108 = vrot.slane %v100, %v107
    %v110 = vunpack.c.l.s4 1966171168
    %v111 = vunpack.c.0.s8 %v110
    %v112 = vlaneseq
    %v113 = vshrl.u32 %v112, 7
    %v114 = vsub.s32 %v111, %v113
    %v115 = vrot.slane %v101, %v114
    %v116 = vcombine.high %v108, %v108
    %v117 = vcombine.high %v115, %v115
    %v186 = vunpack.c.l.b16 %v29
    %v187 = vunpack.c.l.b16 %v30
    %v188 = vunpack.c.l.b16 %v31
    %v189 = vunpack.c.l.b16 %v32
    %v190 = vunpack.c.l.b16 %v33
    %v191 = vunpack.c.l.b16 %v34
    %v192 = vunpack.c.l.b16 %v35
    %v193 = vunpack.c.l.b16 %v36
    %v194 = vunpack.c.l.b16 %v37
    %v195 = vunpack.c.l.b16 %v38
    %v196 = vunpack.c.l.b16 %v39
    %v197 = vunpack.c.l.b16 %v40
    %v198 = vunpack.c.l.b16 %v41
    %v199 = vunpack.c.l.b16 %v42
    %v200 = vunpack.c.l.b16 %v43
    %v201 = vunpack.c.l.b16 %v44
    %v202 = vunpack.c.l.b16 %v45
    %v203 = vunpack.c.l.b16 %v46
    %v204 = vunpack.c.l.b16 %v47
    %v205 = vunpack.c.l.b16 %v48
    %v206 = vunpack.c.l.b16 %v49
    %v207 = vunpack.c.l.b16 %v50
    %v208 = vunpack.c.l.b16 %v51
    %v209 = vunpack.c.l.b16 %v52
    %v210 = vunpack.c.l.b16 %v53
    %v211 = vunpack.c.l.b16 %v54
    %v212 = vunpack.c.l.b16 %v55
    %v213 = vunpack.c.l.b16 %v56
    %v214 = vunpack.c.l.b16 %v57
    %v215 = vunpack.c.l.b16 %v58
    %v216 = vunpack.c.l.b16 %v59
    %v217 = vunpack.c.l.b16 %v60
    %v218 = vunpack.c.l.b16 %v61
    %v219 = vunpack.c.l.b16 %v62
    %v220 = vunpack.c.l.b16 %v63
    %v221 = vunpack.c.l.b16 %v64
    %v222 = vunpack.c.l.b16 %v65
    %v223 = vunpack.c.l.b16 %v66
    %v224 = vunpack.c.l.b16 %v67
    %v225 = vunpack.c.l.b16 %v68
    %v226 = vunpack.c.l.b16 %v69
    %v227 = vunpack.c.l.b16 %v70
    %v228 = vunpack.c.l.b16 %v71
    %v229 = vunpack.c.l.b16 %v72
    %v230 = vunpack.c.l.b16 %v73
    %v231 = vunpack.c.l.b16 %v74
    %v232 = vunpack.c.l.b16 %v75
    %v233 = vunpack.c.l.b16 %v76
    %v234 = vunpack.c.l.b16 %v77
    %v235 = vunpack.c.l.b16 %v78
    %v236 = vunpack.c.l.b16 %v79
    %v237 = vunpack.c.l.b16 %v80
    %v238 = vunpack.c.l.b16 %v81
    %v239 = vunpack.c.l.b16 %v82
    %v240 = vunpack.c.l.b16 %v83
    %v241 = vunpack.c.l.b16 %v84
    %v242 = vunpack.c.l.b16 %v85
    %v243 = vunpack.c.l.b16 %v86
    %v244 = vunpack.c.l.b16 %v87
    %v245 = vunpack.c.l.b16 %v88
    %v246 = vunpack.c.l.b16 %v89
    %v247 = vunpack.c.l.b16 %v90
    %v248 = vunpack.c.l.b16 %v91
    %v249 = vunpack.c.l.b16 %v92
    %v250 = vpack.c.b16 %v187, %v186
    %v251 = vpack.c.b16 %v189, %v188
    %v252 = vpack.c.b16 %v191, %v190
    %v253 = vpack.c.b16 %v193, %v192
    %v254 = vpack.c.b16 %v195, %v194
    %v255 = vpack.c.b16 %v197, %v196
    %v256 = vpack.c.b16 %v199, %v198
    %v257 = vpack.c.b16 %v201, %v200
    %v258 = vpack.c.b16 %v203, %v202
    %v259 = vpack.c.b16 %v205, %v204
    %v260 = vpack.c.b16 %v207, %v206
    %v261 = vpack.c.b16 %v209, %v208
    %v262 = vpack.c.b16 %v211, %v210
    %v263 = vpack.c.b16 %v213, %v212
    %v264 = vpack.c.b16 %v215, %v214
    %v265 = vpack.c.b16 %v217, %v216
    %v266 = vpack.c.b16 %v219, %v218
    %v267 = vpack.c.b16 %v221, %v220
    %v268 = vpack.c.b16 %v223, %v222
    %v269 = vpack.c.b16 %v225, %v224
    %v270 = vpack.c.b16 %v227, %v226
    %v271 = vpack.c.b16 %v229, %v228
    %v272 = vpack.c.b16 %v231, %v230
    %v273 = vpack.c.b16 %v233, %v232
    %v274 = vpack.c.b16 %v235, %v234
    %v275 = vpack.c.b16 %v237, %v236
    %v276 = vpack.c.b16 %v239, %v238
    %v277 = vpack.c.b16 %v241, %v240
    %v278 = vpack.c.b16 %v243, %v242
    %v279 = vpack.c.b16 %v245, %v244
    %v280 = vpack.c.b16 %v247, %v246
    %v281 = vpack.c.b16 %v249, %v248
    %314 = vmatprep.subr.bf16.mxu0 0
    %315 = vmatpush1.bf16.msra.mxu0 %v250
    %316 = vmatprep.subr.bf16.mxu0 0
    %317 = vmatpush1.bf16.msra.mxu0 %v251
    %318 = vmatprep.subr.bf16.mxu0 0
    %319 = vmatpush1.bf16.msra.mxu0 %v252
    %320 = vmatprep.subr.bf16.mxu0 0
    %321 = vmatpush1.bf16.msra.mxu0 %v253
    %322 = vmatprep.subr.bf16.mxu0 0
    %323 = vmatpush1.bf16.msra.mxu0 %v254
    %324 = vmatprep.subr.bf16.mxu0 0
    %325 = vmatpush1.bf16.msra.mxu0 %v255
    %326 = vmatprep.subr.bf16.mxu0 0
    %327 = vmatpush1.bf16.msra.mxu0 %v256
    %328 = vmatprep.subr.bf16.mxu0 0
    %329 = vmatpush1.bf16.msra.mxu0 %v257
    %330 = vmatprep.subr.bf16.mxu0 0
    %331 = vmatpush1.bf16.msra.mxu0 %v258
    %332 = vmatprep.subr.bf16.mxu0 0
    %333 = vmatpush1.bf16.msra.mxu0 %v259
    %334 = vmatprep.subr.bf16.mxu0 0
    %335 = vmatpush1.bf16.msra.mxu0 %v260
    %336 = vmatprep.subr.bf16.mxu0 0
    %337 = vmatpush1.bf16.msra.mxu0 %v261
    %338 = vmatprep.subr.bf16.mxu0 0
    %339 = vmatpush1.bf16.msra.mxu0 %v262
    %340 = vmatprep.subr.bf16.mxu0 0
    %341 = vmatpush1.bf16.msra.mxu0 %v263
    %342 = vmatprep.subr.bf16.mxu0 0
    %343 = vmatpush1.bf16.msra.mxu0 %v264
    %344 = vmatprep.subr.bf16.mxu0 0
    %345 = vmatpush1.bf16.msra.mxu0 %v265
    %346 = vmatprep.mubr.bf16.mxu0 %v115
    %347 = vmatmul.mubr.bf16.gmra.mrb[0].mxu0 %v108
    %v348 = vpop.f32.mrb[0].mxu0
    %v349 = vadd.f32 0.0, %v348
    %v350 = vpop.f32.mrb[0].mxu0
    %v351 = vpop.f32.mrb[0].mxu0
    %v352 = vpop.f32.mrb[0].mxu0
    %353 = vdwg.mxu0
    %354 = vmatprep.subr.bf16.mxu0 0
    %355 = vmatpush1.bf16.msra.mxu0 %v266
    %356 = vmatprep.subr.bf16.mxu0 0
    %357 = vmatpush1.bf16.msra.mxu0 %v267
    %358 = vmatprep.subr.bf16.mxu0 0
    %359 = vmatpush1.bf16.msra.mxu0 %v268
    %360 = vmatprep.subr.bf16.mxu0 0
    %361 = vmatpush1.bf16.msra.mxu0 %v269
    %362 = vmatprep.subr.bf16.mxu0 0
    %363 = vmatpush1.bf16.msra.mxu0 %v270
    %364 = vmatprep.subr.bf16.mxu0 0
    %365 = vmatpush1.bf16.msra.mxu0 %v271
    %366 = vmatprep.subr.bf16.mxu0 0
    %367 = vmatpush1.bf16.msra.mxu0 %v272
    %368 = vmatprep.subr.bf16.mxu0 0
    %369 = vmatpush1.bf16.msra.mxu0 %v273
    %370 = vmatprep.subr.bf16.mxu0 0
    %371 = vmatpush1.bf16.msra.mxu0 %v274
    %372 = vmatprep.subr.bf16.mxu0 0
    %373 = vmatpush1.bf16.msra.mxu0 %v275
    %374 = vmatprep.subr.bf16.mxu0 0
    %375 = vmatpush1.bf16.msra.mxu0 %v276
    %376 = vmatprep.subr.bf16.mxu0 0
    %377 = vmatpush1.bf16.msra.mxu0 %v277
    %378 = vmatprep.subr.bf16.mxu0 0
    %379 = vmatpush1.bf16.msra.mxu0 %v278
    %380 = vmatprep.subr.bf16.mxu0 0
    %381 = vmatpush1.bf16.msra.mxu0 %v279
    %382 = vmatprep.subr.bf16.mxu0 0
    %383 = vmatpush1.bf16.msra.mxu0 %v280
    %384 = vmatprep.subr.bf16.mxu0 0
    %385 = vmatpush1.bf16.msra.mxu0 %v281
    %386 = vmatprep.mubr.bf16.mxu0 %v117
    %387 = vmatmul.mubr.bf16.gmra.mrb[0].mxu0 %v116
    %v388 = vpop.f32.mrb[0].mxu0
    %v389 = vadd.f32 %v349, %v388
    %v390 = vpop.f32.mrb[0].mxu0
    %v391 = vpop.f32.mrb[0].mxu0
    %v392 = vpop.f32.mrb[0].mxu0
    %393 = vdwg.mxu0
    %v394 = vadd.f32 %v27, %v389
    %395 = vst [vmem:[#allocation2] sm:$0x3] %v394
    // Predicated region
    $region26: #{screen_action_net.5} parent=1 // pred_check
      %p396 = pneg %p22
    $region27: #{screen_action_net.5} parent=1 // pred_check_branch
      %398 = sbr.rel (%p396) target = $region29
    $region28: #{screen_action_net.5} parent=1 // pred_region
      %v399 = vld [vmem:[#allocation2] sm:$0x3]
      %v400 = vld [vmem:[%s2] sm:$0x1]
      %v402 = vlaneseq
      %v403 = vshrl.u32 %v402, 7
      %v404 = vsub.s32 0, %v403
      %v405 = vrot.slane %v400, %v404
      %v407 = vadd.f32 %v399, %v405
      %v408 = vmax.f32 %v407, 0.0
      %v409 = vpack.c.bf16 %v408, %v408
      %v410 = vld [vmem:[%s3] sm:$0xf]
      %v411 = vld [vmem:[%s3 + $0x4] sm:$0xf]
      %v412 = vld [vmem:[%s3 + $0x8] sm:$0xf]
      %v413 = vld [vmem:[%s3 + $0xc] sm:$0xf]
      %v414 = vld [vmem:[%s3 + $0x10] sm:$0xf]
      %v415 = vld [vmem:[%s3 + $0x14] sm:$0xf]
      %v416 = vld [vmem:[%s3 + $0x18] sm:$0xf]
      %v417 = vld [vmem:[%s3 + $0x1c] sm:$0xf]
      %v418 = vld [vmem:[%s3 + $0x20] sm:$0xf]
      %v419 = vld [vmem:[%s3 + $0x24] sm:$0xf]
      %v420 = vld [vmem:[%s3 + $0x28] sm:$0xf]
      %v421 = vld [vmem:[%s3 + $0x2c] sm:$0xf]
      %v422 = vld [vmem:[%s3 + $0x30] sm:$0xf]
      %v423 = vld [vmem:[%s3 + $0x34] sm:$0xf]
      %v424 = vld [vmem:[%s3 + $0x38] sm:$0xf]
      %v425 = vld [vmem:[%s3 + $0x3c] sm:$0xf]
      %v426 = vld [vmem:[%s4] sm:$0x1]
      %v428 = vlaneseq
      %v429 = vshrl.u32 %v428, 7
      %v430 = vsub.s32 0, %v429
      %v431 = vrot.slane %v426, %v430
      %v449 = vunpack.c.l.b16 %v410
      %v450 = vunpack.c.l.b16 %v411
      %v451 = vunpack.c.l.b16 %v412
      %v452 = vunpack.c.l.b16 %v413
      %v453 = vunpack.c.l.b16 %v414
      %v454 = vunpack.c.l.b16 %v415
      %v455 = vunpack.c.l.b16 %v416
      %v456 = vunpack.c.l.b16 %v417
      %v457 = vunpack.c.l.b16 %v418
      %v458 = vunpack.c.l.b16 %v419
      %v459 = vunpack.c.l.b16 %v420
      %v460 = vunpack.c.l.b16 %v421
      %v461 = vunpack.c.l.b16 %v422
      %v462 = vunpack.c.l.b16 %v423
      %v463 = vunpack.c.l.b16 %v424
      %v464 = vunpack.c.l.b16 %v425
      %v465 = vpack.c.b16 %v450, %v449
      %v466 = vpack.c.b16 %v452, %v451
      %v467 = vpack.c.b16 %v454, %v453
      %v468 = vpack.c.b16 %v456, %v455
      %v469 = vpack.c.b16 %v458, %v457
      %v470 = vpack.c.b16 %v460, %v459
      %v471 = vpack.c.b16 %v462, %v461
      %v472 = vpack.c.b16 %v464, %v463
      %481 = vmatprep.subr.bf16.mxu0 0
      %482 = vmatpush1.bf16.msra.mxu0 %v465
      %483 = vmatprep.subr.bf16.mxu0 0
      %484 = vmatpush1.bf16.msra.mxu0 %v466
      %485 = vmatprep.subr.bf16.mxu0 0
      %486 = vmatpush1.bf16.msra.mxu0 %v467
      %487 = vmatprep.subr.bf16.mxu0 0
      %488 = vmatpush1.bf16.msra.mxu0 %v468
      %489 = vmatprep.subr.bf16.mxu0 0
      %490 = vmatpush1.bf16.msra.mxu0 %v469
      %491 = vmatprep.subr.bf16.mxu0 0
      %492 = vmatpush1.bf16.msra.mxu0 %v470
      %493 = vmatprep.subr.bf16.mxu0 0
      %494 = vmatpush1.bf16.msra.mxu0 %v471
      %495 = vmatprep.subr.bf16.mxu0 0
      %496 = vmatpush1.bf16.msra.mxu0 %v472
      %497 = vmatprep.subr.bf16.mxu0 0
      %498 = vmatpush1.bf16.msra.mxu0 0
      %499 = vmatprep.subr.bf16.mxu0 0
      %500 = vmatpush1.bf16.msra.mxu0 0
      %501 = vmatprep.subr.bf16.mxu0 0
      %502 = vmatpush1.bf16.msra.mxu0 0
      %503 = vmatprep.subr.bf16.mxu0 0
      %504 = vmatpush1.bf16.msra.mxu0 0
      %505 = vmatprep.subr.bf16.mxu0 0
      %506 = vmatpush1.bf16.msra.mxu0 0
      %507 = vmatprep.subr.bf16.mxu0 0
      %508 = vmatpush1.bf16.msra.mxu0 0
      %509 = vmatprep.subr.bf16.mxu0 0
      %510 = vmatpush1.bf16.msra.mxu0 0
      %511 = vmatprep.subr.bf16.mxu0 0
      %512 = vmatpush1.bf16.msra.mxu0 0
      %513 = vmatprep.mubr.bf16.mxu0 0
      %514 = vmatmul.mubr.bf16.gmra.mrb[0].mxu0 %v409
      %v515 = vpop.f32.mrb[0].mxu0
      %v516 = vadd.f32 %v431, %v515
      %v517 = vpop.f32.mrb[0].mxu0
      %v518 = vpop.f32.mrb[0].mxu0
      %v519 = vpop.f32.mrb[0].mxu0
      %520 = vdwg.mxu0
      %vm521 = vcmask 25600
      %522 = vst.msk [vmem:[#allocation3] sm:$0x3] %vm521, %v516
    $region29: #{screen_action_net.5} parent=1 // pred_fallthru
      _
    // Predicated region
    $region30: #{screen_action_net.5} parent=1 // pred_check
      _
    $region31: #{screen_action_net.5} parent=1 // pred_check_branch
      %524 = sbr.rel (0) target = $region33
    $region32: #{screen_action_net.5} parent=1 // pred_region
      %s526 = ssub.s32 32, 32
      %527 = vsyncadd [#allocation4], %s526
      %s529 = sshll.u32 [#allocation3], 4
      %s530 = int_to_ptr.vmem [resolvable:$true] %s529
      %532 = dma.vmem_to_hbm [thread:$0]  %s530, 32, %s5, [#allocation4]
    $region33: #{screen_action_net.5} parent=1 // pred_fallthru
      _
    // Predicated region
    $region34: #{screen_action_net.5} parent=1 // pred_check
      _
    $region35: #{screen_action_net.5} parent=1 // pred_check_branch
      %534 = sbr.rel (0) target = $region37
    $region36: #{screen_action_net.5} parent=1 // pred_region
      %535 = dma.done [#allocation4], 32
    $region37: #{screen_action_net.5} parent=1 // pred_fallthru
      _
    %536 = vsyncpa [#allocation4], 1

</llo_original>
